<compile_context>
chip_gen: v7x
topology: tpu7x:2x2x1
jax: 0.10.0
libtpu: 0.0.40
codegen_flags: <defaults>
</compile_context>

<pallas_src>
import functools

import jax
import jax.numpy as jnp
from jax.experimental import pallas as pl
from jax.experimental.pallas import tpu as pltpu


_LANE = 128
_ROW_TILE = 256          # row tile for the tiled path (fills the 256-row MXU)


def _round_up(x, m):
    return (x + m - 1) // m * m


@functools.lru_cache(maxsize=1)
def _vmem_budgets():
    """(fused-A budget, scoped vmem limit) derived from the chip generation."""
    try:
        cap = int(pltpu.get_tpu_info().vmem_capacity_bytes)
    except Exception:                       # defensive default: v5e/v6e class
        cap = 128 * 1024 * 1024
    if cap >= 100 * (1 << 20):
        # v5e / v6e: 128 MiB physical VMEM, single TensorCore.
        return 40 * (1 << 20), 64 * (1 << 20)
    # v7x class: 64 MiB physical, 2 TensorCores -> smaller fused budget so the
    # row-parallel tiled path (which uses both cores) wins near the crossover.
    return 14 * (1 << 20), 32 * (1 << 20)


# ---------------------------------------------------------------------------
# Kernel 1: fully fused stage (small/medium graphs — A, x, W all resident).
# grid = (num_layers,); carried node state lives in a VMEM scratch.
# ---------------------------------------------------------------------------
def _sp_gnn_fused_kernel(alpha_ref,  # SMEM (L, k_max)       softmax(alpha) per layer
                         x_ref,      # VMEM (Np, Dp) f32     initial node features
                         w_ref,      # VMEM (Dp, Dp) bf16    W[t]
                         b_ref,      # VMEM (1, Dp)  f32     bias[t]
                         a_ref,      # VMEM (k_max, Np, Np)  bf16, all hops resident
                         out_ref,    # VMEM (Np, Dp) f32
                         x_sc):      # VMEM (Np, Dp) f32     carried node state
    t = pl.program_id(0)

    @pl.when(t == 0)
    def _load_input():
        x_sc[...] = x_ref[...]

    x_in = x_sc[...]

    # xw = x_in @ W[t] + b[t]   (bf16 MXU inputs, f32 accumulation; kept bf16 so
    # the hop matmuls run pure-bf16 MXU)
    xw = (jnp.dot(x_in.astype(jnp.bfloat16), w_ref[...],
                  preferred_element_type=jnp.float32)
          + b_ref[...]).astype(jnp.bfloat16)

    # h = sum_k alpha[t,k] * (A_hat_k @ xw)   — register accumulation, no
    # zero-fill, static unroll over hops, f32 accumulation.
    acc = jnp.dot(a_ref[0], xw, preferred_element_type=jnp.float32) * alpha_ref[t, 0]
    for k in range(1, a_ref.shape[0]):
        acc = acc + (jnp.dot(a_ref[k], xw, preferred_element_type=jnp.float32)
                     * alpha_ref[t, k])

    # x = l2_normalize(x_in + relu(h)); rsqrt on the EUP.  Clamping the squared
    # norm at 1e-24 is exactly F.normalize's max(||h||, 1e-12) denominator.
    h = x_in + jnp.maximum(acc, 0.0)
    inv = jax.lax.rsqrt(jnp.maximum(jnp.sum(h * h, axis=-1, keepdims=True), 1e-24))
    new_x = h * inv
    x_sc[...] = new_x

    @pl.when(t == pl.num_programs(0) - 1)
    def _store():
        out_ref[...] = new_x


def _sp_gnn_fused(alpha_sm, xp, Wp, bp, Ap, num_layers, vmem_limit):
    Np, Dp = xp.shape
    k_max = Ap.shape[0]
    flops = num_layers * (2 * Np * Dp * Dp + 2 * k_max * Np * Np * Dp)
    bytes_acc = (xp.size * 4 + Wp.size * 2 + bp.size * 4 + Ap.size * 2
                 + Np * Dp * 4)
    return pl.pallas_call(
        _sp_gnn_fused_kernel,
        out_shape=jax.ShapeDtypeStruct((Np, Dp), jnp.float32),
        grid_spec=pltpu.PrefetchScalarGridSpec(
            num_scalar_prefetch=0,
            grid=(num_layers,),
            in_specs=[
                pl.BlockSpec(memory_space=pltpu.MemorySpace.SMEM),            # alpha
                pl.BlockSpec((Np, Dp), lambda t: (0, 0),
                             pipeline_mode=pl.Buffered(1)),                   # x (const)
                pl.BlockSpec((pl.Squeezed(), Dp, Dp), lambda t: (t, 0, 0)),   # W[t]
                pl.BlockSpec((pl.Squeezed(), 1, Dp), lambda t: (t, 0, 0)),    # b[t]
                pl.BlockSpec((k_max, Np, Np), lambda t: (0, 0, 0),
                             pipeline_mode=pl.Buffered(1)),                   # A (const)
            ],
            out_specs=pl.BlockSpec((Np, Dp), lambda t: (0, 0)),
            scratch_shapes=[pltpu.VMEM((Np, Dp), jnp.float32)],               # x_sc
        ),
        compiler_params=pltpu.CompilerParams(
            dimension_semantics=("arbitrary",),
            vmem_limit_bytes=int(vmem_limit)),
        cost_estimate=pl.CostEstimate(
            flops=flops, transcendentals=num_layers * Np, bytes_accessed=bytes_acc),
    )(alpha_sm, xp, Wp, bp, Ap)


# ---------------------------------------------------------------------------
# Kernel 2: one layer, row-tiled over nodes (large graphs).
# alpha is pre-folded into A_eff[t] (XLA glue) so there is no hop axis:
# grid = (row_tiles,), "parallel" (v7x megacore).  xw = x @ W + b is
# precomputed in XLA (bf16) and held resident.
# ---------------------------------------------------------------------------
def _sp_gnn_layer_tiled_kernel(x_ref,    # VMEM (TM, Dp) f32    layer-input rows
                               xw_ref,   # VMEM (Np, Dp) bf16   x @ W + b (resident)
                               a_ref,    # VMEM (TM, Np) bf16   A_eff[t] row tile
                               out_ref): # VMEM (TM, Dp) f32
    # h_rows = A_eff[rows] @ xw  (bf16 MXU, f32 accumulation), then the
    # residual + ReLU + L2-normalize epilogue (rsqrt on the EUP).
    h = x_ref[...] + jnp.maximum(
        jnp.dot(a_ref[...], xw_ref[...], preferred_element_type=jnp.float32), 0.0)
    inv = jax.lax.rsqrt(jnp.maximum(jnp.sum(h * h, axis=-1, keepdims=True), 1e-24))
    out_ref[...] = h * inv


def _sp_gnn_layer_tiled(xp, xw_bf16, a_eff_t, TM, vmem_limit):
    Np, Dp = xp.shape
    n_tiles = Np // TM
    flops = 2 * Np * Np * Dp
    bytes_acc = Np * Np * 2 + Np * Dp * (4 + 2 + 4)
    return pl.pallas_call(
        _sp_gnn_layer_tiled_kernel,
        out_shape=jax.ShapeDtypeStruct((Np, Dp), jnp.float32),
        grid_spec=pltpu.PrefetchScalarGridSpec(
            num_scalar_prefetch=0,
            grid=(n_tiles,),
            in_specs=[
                pl.BlockSpec((TM, Dp), lambda i: (i, 0)),                    # x rows
                pl.BlockSpec((Np, Dp), lambda i: (0, 0),
                             pipeline_mode=pl.Buffered(1)),                  # xw (const)
                pl.BlockSpec((TM, Np), lambda i: (i, 0)),                    # A_eff rows
            ],
            out_specs=pl.BlockSpec((TM, Dp), lambda i: (i, 0)),
        ),
        compiler_params=pltpu.CompilerParams(
            dimension_semantics=("parallel",),
            vmem_limit_bytes=int(vmem_limit)),
        cost_estimate=pl.CostEstimate(
            flops=flops, transcendentals=Np, bytes_accessed=bytes_acc),
    )(xp, xw_bf16, a_eff_t)


# ---------------------------------------------------------------------------
# Glue: dense normalized adjacencies (bf16) from (edge_index, edge_attr).
# ---------------------------------------------------------------------------
def build_dense_adjacencies(edge_index, edge_attr, num_nodes, k_max):
    src, dst = edge_index[0], edge_index[1]
    mats = []
    for k in range(1, k_max + 1):
        mask = (edge_attr == k).astype(jnp.float32)
        a = jnp.zeros((num_nodes, num_nodes), jnp.float32).at[dst, src].add(mask)
        deg_r = jnp.maximum(a.sum(axis=1, keepdims=True), 1.0)
        deg_c = jnp.maximum(a.sum(axis=0, keepdims=True), 1.0)
        mats.append(a / jnp.sqrt(deg_r) / jnp.sqrt(deg_c))
    # bf16 storage: the A stream dominates HBM traffic; accumulation stays f32.
    return jnp.stack(mats, axis=0).astype(jnp.bfloat16)


@functools.partial(jax.jit, static_argnames=("num_layers", "force_tiled"))
def sp_gnn_stage(x, Ws, bs, alpha_raw, a_dense, num_layers, force_tiled=False):
    N, D = x.shape
    k_max = a_dense.shape[0]
    Dp = _round_up(D, _LANE)                        # lane-dense feature dim
    alpha_sm = jax.nn.softmax(alpha_raw, axis=-1)   # (L, k_max)

    fused_a_budget, vmem_limit = _vmem_budgets()
    Np128 = _round_up(max(N, 1), _LANE)             # lane/sublane-dense node dim
    use_fused = (not force_tiled) and (k_max * Np128 * Np128 * 2 <= fused_a_budget)

    if use_fused:
        Np, TM = Np128, None
    else:
        TM = min(_ROW_TILE, Np128)
        # keep double-buffered A row-tile + resident xw + x/out tiles within the
        # scoped VMEM limit; shrink the row tile if necessary (v7x has half the
        # VMEM of v5e/v6e).
        while TM > _LANE and (2 * (2 * TM * Np128 * 2) + Np128 * Dp * 2
                              + 4 * TM * Dp * 4) > vmem_limit:
            TM //= 2
        Np = _round_up(N, TM)

    # Zero-pad nodes and features to lane/tile boundaries.  Padded rows/cols stay
    # exactly zero through every layer, so slicing at the end is exact.
    xp = jnp.pad(x.astype(jnp.float32), ((0, Np - N), (0, Dp - D)))
    Wp = jnp.pad(Ws.astype(jnp.float32),
                 ((0, 0), (0, Dp - D), (0, Dp - D))).astype(jnp.bfloat16)
    bp = jnp.pad(bs.astype(jnp.float32), ((0, 0), (0, Dp - D)))[:, None, :]

    if use_fused:
        Ap = jnp.pad(a_dense, ((0, 0), (0, Np - N), (0, Np - N)))
        out = _sp_gnn_fused(alpha_sm, xp, Wp, bp, Ap, num_layers, vmem_limit)
        return out[:N, :D]

    # Tiled path: fold alpha into one effective adjacency per layer so the
    # kernel streams Np^2 bytes (not k_max*Np^2) and does one matmul per tile.
    a_eff = jnp.einsum("lk,kij->lij", alpha_sm,
                       a_dense.astype(jnp.float32)).astype(jnp.bfloat16)
    a_eff = jnp.pad(a_eff, ((0, 0), (0, Np - N), (0, Np - N)))

    out = xp
    for t in range(num_layers):
        xw = (jnp.dot(out.astype(jnp.bfloat16), Wp[t],
                      preferred_element_type=jnp.float32)
              + bp[t]).astype(jnp.bfloat16)
        out = _sp_gnn_layer_tiled(out, xw, a_eff[t], TM, vmem_limit)
    return out[:N, :D]


# ---------------------------------------------------------------------------
# Pure-JAX reference (f32 math on the same bf16-quantized adjacencies).
# ---------------------------------------------------------------------------
def sp_gnn_stage_ref(x, Ws, bs, alpha_raw, a_dense, num_layers):
    a_f32 = a_dense.astype(jnp.float32)
    k_max = a_f32.shape[0]
    for t in range(num_layers):
        alpha_t = jax.nn.softmax(alpha_raw[t], axis=0)
        xw = x @ Ws[t] + bs[t][None, :]
        h = jnp.zeros_like(x)
        for k in range(k_max):
            h = h + alpha_t[k] * (a_f32[k] @ xw)
        h = x + jax.nn.relu(h)
        x = h / jnp.maximum(jnp.sqrt(jnp.sum(h * h, axis=-1, keepdims=True)), 1e-12)
    return x


def _make_example(key, N, D, E, num_layers, k_max):
    k_x, k_src, k_dst, k_attr, k_w, k_b, k_a = jax.random.split(key, 7)
    x = jax.random.normal(k_x, (N, D), jnp.float32)
    edge_index = jnp.stack(
        [jax.random.randint(k_src, (E,), 0, N), jax.random.randint(k_dst, (E,), 0, N)]
    )
    edge_attr = jax.random.randint(k_attr, (E,), 1, k_max + 1)
    Ws = 0.1 * jax.random.normal(k_w, (num_layers, D, D), jnp.float32)
    bs = 0.01 * jax.random.normal(k_b, (num_layers, D), jnp.float32)
    alpha_raw = jax.random.normal(k_a, (num_layers, k_max), jnp.float32)
    return x, edge_index, edge_attr, Ws, bs, alpha_raw


if __name__ == "__main__":
    key = jax.random.PRNGKey(0)
    num_layers = 3
    cfg_k_max = 3
    k_max = min(num_layers, cfg_k_max)
    D = 32                         # dim_in == dim_out

    # --- Test 1: small graph -> fused whole-stage kernel -------------------
    N1, E1 = 64, 256
    key, sub = jax.random.split(key)
    x1, ei1, ea1, Ws1, bs1, al1 = _make_example(sub, N1, D, E1, num_layers, k_max)
    a1 = build_dense_adjacencies(ei1, ea1, N1, k_max)

    out1 = jax.block_until_ready(sp_gnn_stage(x1, Ws1, bs1, al1, a1, num_layers))
    ref1 = sp_gnn_stage_ref(x1, Ws1, bs1, al1, a1, num_layers)
    assert out1.shape == (N1, D) and out1.dtype == jnp.float32
    assert jnp.allclose(out1, ref1, atol=2e-2, rtol=2e-2), "fused path mismatch"

    # --- Test 2: larger graph, forced row-tiled per-layer kernel -----------
    N2, E2 = 200, 800              # pads to Np=256
    key, sub = jax.random.split(key)
    x2, ei2, ea2, Ws2, bs2, al2 = _make_example(sub, N2, D, E2, num_layers, k_max)
    a2 = build_dense_adjacencies(ei2, ea2, N2, k_max)

    out2 = jax.block_until_ready(
        sp_gnn_stage(x2, Ws2, bs2, al2, a2, num_layers, force_tiled=True))
    ref2 = sp_gnn_stage_ref(x2, Ws2, bs2, al2, a2, num_layers)
    assert out2.shape == (N2, D) and out2.dtype == jnp.float32
    assert jnp.allclose(out2, ref2, atol=2e-2, rtol=2e-2), "tiled path mismatch"

    print("KERNEL_OK")
</pallas_src>

<mosaic_0001>
module attributes {stable_mosaic.version = 11 : i64} {
  func.func @_sp_gnn_fused_kernel(%arg0: i32, %arg1: memref<3x3xf32, #tpu.memory_space<smem>>, %arg2: memref<128x128xf32, #tpu.memory_space<vmem>>, %arg3: memref<1x128x128xbf16, #tpu.memory_space<vmem>>, %arg4: memref<1x1x128xf32, #tpu.memory_space<vmem>>, %arg5: memref<3x128x128xbf16, #tpu.memory_space<vmem>>, %arg6: memref<128x128xf32, #tpu.memory_space<vmem>>, %arg7: memref<128x128xf32, #tpu.memory_space<vmem>>) attributes {dimension_semantics = [#tpu.dimension_semantics<arbitrary>], iteration_bounds = array<i64: 3>, scalar_prefetch = 0 : i64, scratch_operands = 1 : i64, tpu.core_type = #tpu.core_type<tc>, window_params = [{transform_indices = @transform_0, window_bounds = array<i64: 3, 3>}, {pipeline_mode = #tpu.pipeline_mode<synchronous>, transform_indices = @transform_1, window_bounds = array<i64: 128, 128>}, {transform_indices = @transform_2, window_bounds = array<i64: 1, 128, 128>}, {transform_indices = @transform_3, window_bounds = array<i64: 1, 1, 128>}, {pipeline_mode = #tpu.pipeline_mode<synchronous>, transform_indices = @transform_4, window_bounds = array<i64: 3, 128, 128>}, {pipeline_mode = #tpu.pipeline_mode<synchronous>, transform_indices = @transform_5, window_bounds = array<i64: 128, 128>}]} {
    %c0_i32 = arith.constant 0 : i32
    %0 = arith.cmpi eq, %arg0, %c0_i32 : i32
    %1 = arith.extui %0 : i1 to i32
    %c0_i32_0 = arith.constant 0 : i32
    %2 = arith.cmpi ne, %1, %c0_i32_0 : i32
    scf.if %2 {
      %c0_27 = arith.constant 0 : index
      %c0_28 = arith.constant 0 : index
      %51 = vector.load %arg2[%c0_27, %c0_28] : memref<128x128xf32, #tpu.memory_space<vmem>>, vector<128x128xf32>
      %c0_29 = arith.constant 0 : index
      %c0_30 = arith.constant 0 : index
      %52 = vector.load %arg7[%c0_29, %c0_30] : memref<128x128xf32, #tpu.memory_space<vmem>>, vector<128x128xf32>
      tpu.vector_store %arg7[%c0_29, %c0_30], %51 {strides = array<i32>} : memref<128x128xf32, #tpu.memory_space<vmem>>, vector<128x128xf32>,
    } else {
    }
    %c0 = arith.constant 0 : index
    %c0_1 = arith.constant 0 : index
    %3 = vector.load %arg7[%c0, %c0_1] : memref<128x128xf32, #tpu.memory_space<vmem>>, vector<128x128xf32>
    %4 = arith.truncf %3 : vector<128x128xf32> to vector<128x128xbf16>
    %c0_2 = arith.constant 0 : index
    %c0_3 = arith.constant 0 : index
    %c0_4 = arith.constant 0 : index
    %5 = vector.load %arg3[%c0_2, %c0_3, %c0_4] : memref<1x128x128xbf16, #tpu.memory_space<vmem>>, vector<1x128x128xbf16>
    %6 = vector.shape_cast %5 : vector<1x128x128xbf16> to vector<128x128xbf16>
    %cst = arith.constant dense<0.000000e+00> : vector<128x128xf32>
    %7 = tpu.matmul %4, %6, %cst {dimension_numbers = #tpu.dot_dimension_numbers<[1], [0], [0], [1], [0, 0, 1, 1], [], []>} : vector<128x128xbf16>, vector<128x128xbf16>, vector<128x128xf32> -> vector<128x128xf32>
    %c0_5 = arith.constant 0 : index
    %c0_6 = arith.constant 0 : index
    %c0_7 = arith.constant 0 : index
    %8 = vector.load %arg4[%c0_5, %c0_6, %c0_7] : memref<1x1x128xf32, #tpu.memory_space<vmem>>, vector<1x1x128xf32>
    %9 = vector.shape_cast %8 : vector<1x1x128xf32> to vector<1x128xf32>
    %10 = vector.broadcast %9 : vector<1x128xf32> to vector<128x128xf32>
    %11 = arith.addf %7, %10 : vector<128x128xf32>
    %12 = arith.truncf %11 : vector<128x128xf32> to vector<128x128xbf16>
    %c0_8 = arith.constant 0 : index
    %c0_9 = arith.constant 0 : index
    %c0_10 = arith.constant 0 : index
    %13 = vector.load %arg5[%c0_8, %c0_9, %c0_10] : memref<3x128x128xbf16, #tpu.memory_space<vmem>>, vector<1x128x128xbf16>
    %14 = vector.shape_cast %13 : vector<1x128x128xbf16> to vector<128x128xbf16>
    %cst_11 = arith.constant dense<0.000000e+00> : vector<128x128xf32>
    %15 = tpu.matmul %14, %12, %cst_11 {dimension_numbers = #tpu.dot_dimension_numbers<[1], [0], [0], [1], [0, 0, 1, 1], [], []>} : vector<128x128xbf16>, vector<128x128xbf16>, vector<128x128xf32> -> vector<128x128xf32>
    %16 = arith.index_cast %arg0 : i32 to index
    %c0_12 = arith.constant 0 : index
    %17 = memref.load %arg1[%16, %c0_12] : memref<3x3xf32, #tpu.memory_space<smem>>
    %18 = vector.broadcast %17 : f32 to vector<128x128xf32>
    %19 = arith.mulf %15, %18 : vector<128x128xf32>
    %c1 = arith.constant 1 : index
    %c0_13 = arith.constant 0 : index
    %c0_14 = arith.constant 0 : index
    %20 = vector.load %arg5[%c1, %c0_13, %c0_14] : memref<3x128x128xbf16, #tpu.memory_space<vmem>>, vector<1x128x128xbf16>
    %21 = vector.shape_cast %20 : vector<1x128x128xbf16> to vector<128x128xbf16>
    %cst_15 = arith.constant dense<0.000000e+00> : vector<128x128xf32>
    %22 = tpu.matmul %21, %12, %cst_15 {dimension_numbers = #tpu.dot_dimension_numbers<[1], [0], [0], [1], [0, 0, 1, 1], [], []>} : vector<128x128xbf16>, vector<128x128xbf16>, vector<128x128xf32> -> vector<128x128xf32>
    %23 = arith.index_cast %arg0 : i32 to index
    %c1_16 = arith.constant 1 : index
    %24 = memref.load %arg1[%23, %c1_16] : memref<3x3xf32, #tpu.memory_space<smem>>
    %25 = vector.broadcast %24 : f32 to vector<128x128xf32>
    %26 = arith.mulf %22, %25 : vector<128x128xf32>
    %27 = arith.addf %19, %26 : vector<128x128xf32>
    %c2 = arith.constant 2 : index
    %c0_17 = arith.constant 0 : index
    %c0_18 = arith.constant 0 : index
    %28 = vector.load %arg5[%c2, %c0_17, %c0_18] : memref<3x128x128xbf16, #tpu.memory_space<vmem>>, vector<1x128x128xbf16>
    %29 = vector.shape_cast %28 : vector<1x128x128xbf16> to vector<128x128xbf16>
    %cst_19 = arith.constant dense<0.000000e+00> : vector<128x128xf32>
    %30 = tpu.matmul %29, %12, %cst_19 {dimension_numbers = #tpu.dot_dimension_numbers<[1], [0], [0], [1], [0, 0, 1, 1], [], []>} : vector<128x128xbf16>, vector<128x128xbf16>, vector<128x128xf32> -> vector<128x128xf32>
    %31 = arith.index_cast %arg0 : i32 to index
    %c2_20 = arith.constant 2 : index
    %32 = memref.load %arg1[%31, %c2_20] : memref<3x3xf32, #tpu.memory_space<smem>>
    %33 = vector.broadcast %32 : f32 to vector<128x128xf32>
    %34 = arith.mulf %30, %33 : vector<128x128xf32>
    %35 = arith.addf %27, %34 : vector<128x128xf32>
    %cst_21 = arith.constant 0.000000e+00 : f32
    %36 = vector.broadcast %cst_21 : f32 to vector<128x128xf32>
    %37 = arith.maximumf %35, %36 : vector<128x128xf32>
    %38 = arith.addf %3, %37 : vector<128x128xf32>
    %39 = arith.mulf %38, %38 : vector<128x128xf32>
    %cst_22 = arith.constant dense<0.000000e+00> : vector<128xf32>
    %40 = vector.multi_reduction <add>, %39, %cst_22 [1] : vector<128x128xf32> to vector<128xf32>
    %41 = vector.shape_cast %40 : vector<128xf32> to vector<128x1xf32>
    %cst_23 = arith.constant 1.000000e-24 : f32
    %42 = vector.broadcast %cst_23 : f32 to vector<128x1xf32>
    %43 = arith.maximumf %41, %42 : vector<128x1xf32>
    %44 = math.rsqrt %43 : vector<128x1xf32>
    %45 = vector.broadcast %44 : vector<128x1xf32> to vector<128x128xf32>
    %46 = arith.mulf %38, %45 : vector<128x128xf32>
    %c0_24 = arith.constant 0 : index
    %c0_25 = arith.constant 0 : index
    %47 = vector.load %arg7[%c0_24, %c0_25] : memref<128x128xf32, #tpu.memory_space<vmem>>, vector<128x128xf32>
    tpu.vector_store %arg7[%c0_24, %c0_25], %46 {strides = array<i32>} : memref<128x128xf32, #tpu.memory_space<vmem>>, vector<128x128xf32>,
    %c2_i32 = arith.constant 2 : i32
    %48 = arith.cmpi eq, %arg0, %c2_i32 : i32
    %49 = arith.extui %48 : i1 to i32
    %c0_i32_26 = arith.constant 0 : i32
    %50 = arith.cmpi ne, %49, %c0_i32_26 : i32
    scf.if %50 {
      %c0_27 = arith.constant 0 : index
      %c0_28 = arith.constant 0 : index
      %51 = vector.load %arg6[%c0_27, %c0_28] : memref<128x128xf32, #tpu.memory_space<vmem>>, vector<128x128xf32>
      tpu.vector_store %arg6[%c0_27, %c0_28], %46 {strides = array<i32>} : memref<128x128xf32, #tpu.memory_space<vmem>>, vector<128x128xf32>,
    } else {
    }
    return
  }
  func.func @transform_0(%arg0: i32) -> (i32, i32) {
    %c0_i32 = arith.constant 0 : i32
    %c0_i32_0 = arith.constant 0 : i32
    %c0_i32_1 = arith.constant 0 : i32
    return %c0_i32, %c0_i32_0 : i32, i32
  }
  func.func @transform_1(%arg0: i32) -> (i32, i32) {
    %c0_i32 = arith.constant 0 : i32
    %c0_i32_0 = arith.constant 0 : i32
    %c0_i32_1 = arith.constant 0 : i32
    return %c0_i32, %c0_i32_0 : i32, i32
  }
  func.func @transform_2(%arg0: i32) -> (i32, i32, i32) {
    %c0_i32 = arith.constant 0 : i32
    %c0_i32_0 = arith.constant 0 : i32
    %c0_i32_1 = arith.constant 0 : i32
    return %arg0, %c0_i32, %c0_i32_0 : i32, i32, i32
  }
  func.func @transform_3(%arg0: i32) -> (i32, i32, i32) {
    %c0_i32 = arith.constant 0 : i32
    %c0_i32_0 = arith.constant 0 : i32
    %c0_i32_1 = arith.constant 0 : i32
    return %arg0, %c0_i32, %c0_i32_0 : i32, i32, i32
  }
  func.func @transform_4(%arg0: i32) -> (i32, i32, i32) {
    %c0_i32 = arith.constant 0 : i32
    %c0_i32_0 = arith.constant 0 : i32
    %c0_i32_1 = arith.constant 0 : i32
    %c0_i32_2 = arith.constant 0 : i32
    return %c0_i32, %c0_i32_0, %c0_i32_1 : i32, i32, i32
  }
  func.func @transform_5(%arg0: i32) -> (i32, i32) {
    %c0_i32 = arith.constant 0 : i32
    %c0_i32_0 = arith.constant 0 : i32
    %c0_i32_1 = arith.constant 0 : i32
    return %c0_i32, %c0_i32_0 : i32, i32
  }
}

</mosaic_0001>

<llo_original>
// kernel: sp_gnn_stage.1
$region0: #{sp_gnn_stage.1}
  #allocation0 [shape = 'u32[]', space=smem, size = 0x4, offset = 0x4, fixed_abs, tag = 'smem constant byte address 0x4 - core index']
  #allocation1 [shape = 'u32[144,128]{1,0:T(1,128)}', space=vmem, size = 0x12000, scoped, tag = 'internal scratch']
  #allocation2 [shape = 'f32[128,128]{1,0:T(8,128)}', space=vmem, size = 0x10000, scoped, tag = 'scratch operand']
  %s0 = inlined_call_operand.hbm [shape: f32[3,3], index: 0, kind: input, shape index: {}]
  %s1 = inlined_call_operand.hbm [shape: f32[128,128], index: 1, kind: input, shape index: {}]
  %s2 = inlined_call_operand.hbm [shape: bf16[3,128,128], index: 2, kind: input, shape index: {}]
  %s3 = inlined_call_operand.hbm [shape: f32[3,1,128], index: 3, kind: input, shape index: {}]
  %s4 = inlined_call_operand.hbm [shape: bf16[3,128,128], index: 4, kind: input, shape index: {}]
  %s5 = inlined_call_operand.hbm [shape: f32[128,128], index: 5, kind: output, shape index: {}]
  %s6 = sld [smem:[#allocation0]]
  $region81: #{sp_gnn_stage.1} parent=0
    _
  %s8 = ssub.s32 1, %s6
  %s9 = scalar_select 0, %s8, %s6
  $region1: #{sp_gnn_stage.1} parent=0
    #allocation3 [shape = 'u8[2048]{0}', space=smem, size = 0x800, scoped, tag = 'input window, operand 0, single buffered']
    #allocation4 [shape = 's32[2]{0}', space=sflag, size = 0x8, scoped, tag = 'scoped memory for sp_gnn_stage.1']
    #allocation5 [shape = 's32[2]{0}', space=sflag, size = 0x8, scoped, tag = 'scoped memory for sp_gnn_stage.1']
    #allocation6 [shape = 's32[2]{0}', space=sflag, size = 0x8, scoped, tag = 'scoped memory for sp_gnn_stage.1']
    #allocation7 [shape = 'u8[65536]{0}', space=vmem, size = 0x10000, scoped, tag = 'input window, operand 1, single buffered']
    #allocation8 [shape = 'u8[65536]{0}', space=vmem, size = 0x10000, scoped, tag = 'input window, operand 2']
    #allocation9 [shape = 's32[2]{0}', space=sflag, size = 0x8, scoped, tag = 'scoped memory for sp_gnn_stage.1']
    #allocation10 [shape = 'u8[1024]{0}', space=vmem, size = 0x400, scoped, tag = 'input window, operand 3']
    #allocation11 [shape = 'u8[98304]{0}', space=vmem, size = 0x18000, scoped, tag = 'input window, operand 4, single buffered']
    #allocation12 [shape = 's32[1]{0}', space=sflag, size = 0x4, scoped, tag = 'scoped memory for sp_gnn_stage.1']
    #allocation13 [shape = 'u8[65536]{0}', space=vmem, size = 0x10000, scoped, tag = 'output window, operand 0, single buffered']
    %10 = vsyncpa [#allocation6], 0
    %11 = vsyncpa [#allocation4], 0
    %12 = vsyncpa [#allocation9], 0
    %s13 = scalar_lea.sflag [#allocation9], 1
    %14 = vsyncpa %s13, 0
    %15 = vsyncpa [#allocation12], 0
    %16 = vsyncpa [#allocation5], 0
    loop: start=0, step=1, limit=5
    $region2: #{sp_gnn_stage.1} parent=1 // loop_pre_header
      _
    $region3: #{sp_gnn_stage.1} parent=1 // loop_header
      %s18 = sphi 0, %s22
      %p19 = scmp.ge.s32.totalorder %s18, 5
      %s26 = sphi 0, %s26
      %s28 = sphi 0, %s26
      %s29 = sphi 0, %s28
      %s43 = sphi 0, %s29
      %s47 = sphi 0, %s47
      %s49 = sphi 0, %s47
      %s50 = sphi 0, %s49
      %s64 = sphi 0, %s50
      %s70 = sphi 0, %s72
      %s73 = sphi 0, %s70
      %s74 = sphi 0, %s73
      %s90 = sphi 0, %s74
      %s96 = sphi 0, %s98
      %s99 = sphi 0, %s96
      %s100 = sphi 0, %s99
      %s116 = sphi 0, %s100
      %s120 = sphi 0, %s120
      %s122 = sphi 0, %s120
      %s123 = sphi 0, %s122
      %s137 = sphi 0, %s123
      %s141 = sphi 0, %s141
      %s143 = sphi 0, %s141
      %s144 = sphi 0, %s143
      %s158 = sphi 0, %s144
    $region4: #{sp_gnn_stage.1} parent=1 // loop_header_branch
      %21 = sbr.rel (%p19) target = $region8
    $region5: #{sp_gnn_stage.1} parent=1 // loop_body
      %s23 = ssub.s32 %s18, 1
      %s24 = ssub.s32 %s18, 2
      %s25 = sadd.s32 %s18, 1
      %s27 = sadd.s32 %s26, 1
      %p30 = scmp.eq.s32.totalorder %s18, 2
      %p31 = scmp.ne.s32.totalorder %s26, %s28
      %p32 = scmp.eq.s32.totalorder %s18, 0
      %p33 = por %p31, %p32
      %p34 = scmp.ne.s32.totalorder %s26, %s28
      %p35 = scmp.eq.s32.totalorder %s23, 2
      %p36 = por %p34, %p35
      %p37 = scmp.ne.s32.totalorder %s28, %s29
      %p38 = scmp.eq.s32.totalorder %s23, 0
      %p39 = por %p37, %p38
      %p40 = scmp.ne.s32.totalorder %s28, %s29
      %p41 = scmp.eq.s32.totalorder %s24, 2
      %p42 = por %p40, %p41
      %p44 = scmp.ne.s32.totalorder %s29, %s43
      %p45 = scmp.eq.s32.totalorder %s24, 0
      %p46 = por %p44, %p45
      %s48 = sadd.s32 %s47, 1
      %p51 = scmp.eq.s32.totalorder %s18, 2
      %p52 = scmp.ne.s32.totalorder %s47, %s49
      %p53 = scmp.eq.s32.totalorder %s18, 0
      %p54 = por %p52, %p53
      %p55 = scmp.ne.s32.totalorder %s47, %s49
      %p56 = scmp.eq.s32.totalorder %s23, 2
      %p57 = por %p55, %p56
      %p58 = scmp.ne.s32.totalorder %s49, %s50
      %p59 = scmp.eq.s32.totalorder %s23, 0
      %p60 = por %p58, %p59
      %p61 = scmp.ne.s32.totalorder %s49, %s50
      %p62 = scmp.eq.s32.totalorder %s24, 2
      %p63 = por %p61, %p62
      %p65 = scmp.ne.s32.totalorder %s50, %s64
      %p66 = scmp.eq.s32.totalorder %s24, 0
      %p67 = por %p65, %p66
      %s68 = ssub.s32 %s18, %s25
      %p69 = scmp.eq.s32.totalorder %s68, 0
      %s71 = sadd.s32 %s70, 1
      %s72 = scalar_select %p69, %s70, %s71
      %p75 = pneg %p69
      %p76 = scmp.eq.s32.totalorder %s18, 2
      %p77 = por %p75, %p76
      %p78 = scmp.ne.s32.totalorder %s70, %s73
      %p79 = scmp.eq.s32.totalorder %s18, 0
      %p80 = por %p78, %p79
      %p81 = scmp.ne.s32.totalorder %s70, %s73
      %p82 = scmp.eq.s32.totalorder %s23, 2
      %p83 = por %p81, %p82
      %p84 = scmp.ne.s32.totalorder %s73, %s74
      %p85 = scmp.eq.s32.totalorder %s23, 0
      %p86 = por %p84, %p85
      %p87 = scmp.ne.s32.totalorder %s73, %s74
      %p88 = scmp.eq.s32.totalorder %s24, 2
      %p89 = por %p87, %p88
      %p91 = scmp.ne.s32.totalorder %s74, %s90
      %p92 = scmp.eq.s32.totalorder %s24, 0
      %p93 = por %p91, %p92
      %s94 = ssub.s32 %s18, %s25
      %p95 = scmp.eq.s32.totalorder %s94, 0
      %s97 = sadd.s32 %s96, 1
      %s98 = scalar_select %p95, %s96, %s97
      %p101 = pneg %p95
      %p102 = scmp.eq.s32.totalorder %s18, 2
      %p103 = por %p101, %p102
      %p104 = scmp.ne.s32.totalorder %s96, %s99
      %p105 = scmp.eq.s32.totalorder %s18, 0
      %p106 = por %p104, %p105
      %p107 = scmp.ne.s32.totalorder %s96, %s99
      %p108 = scmp.eq.s32.totalorder %s23, 2
      %p109 = por %p107, %p108
      %p110 = scmp.ne.s32.totalorder %s99, %s100
      %p111 = scmp.eq.s32.totalorder %s23, 0
      %p112 = por %p110, %p111
      %p113 = scmp.ne.s32.totalorder %s99, %s100
      %p114 = scmp.eq.s32.totalorder %s24, 2
      %p115 = por %p113, %p114
      %p117 = scmp.ne.s32.totalorder %s100, %s116
      %p118 = scmp.eq.s32.totalorder %s24, 0
      %p119 = por %p117, %p118
      %s121 = sadd.s32 %s120, 1
      %p124 = scmp.eq.s32.totalorder %s18, 2
      %p125 = scmp.ne.s32.totalorder %s120, %s122
      %p126 = scmp.eq.s32.totalorder %s18, 0
      %p127 = por %p125, %p126
      %p128 = scmp.ne.s32.totalorder %s120, %s122
      %p129 = scmp.eq.s32.totalorder %s23, 2
      %p130 = por %p128, %p129
      %p131 = scmp.ne.s32.totalorder %s122, %s123
      %p132 = scmp.eq.s32.totalorder %s23, 0
      %p133 = por %p131, %p132
      %p134 = scmp.ne.s32.totalorder %s122, %s123
      %p135 = scmp.eq.s32.totalorder %s24, 2
      %p136 = por %p134, %p135
      %p138 = scmp.ne.s32.totalorder %s123, %s137
      %p139 = scmp.eq.s32.totalorder %s24, 0
      %p140 = por %p138, %p139
      %s142 = sadd.s32 %s141, 1
      %p145 = scmp.eq.s32.totalorder %s18, 2
      %p146 = scmp.ne.s32.totalorder %s141, %s143
      %p147 = scmp.eq.s32.totalorder %s18, 0
      %p148 = por %p146, %p147
      %p149 = scmp.ne.s32.totalorder %s141, %s143
      %p150 = scmp.eq.s32.totalorder %s23, 2
      %p151 = por %p149, %p150
      %p152 = scmp.ne.s32.totalorder %s143, %s144
      %p153 = scmp.eq.s32.totalorder %s23, 0
      %p154 = por %p152, %p153
      %p155 = scmp.ne.s32.totalorder %s143, %s144
      %p156 = scmp.eq.s32.totalorder %s24, 2
      %p157 = por %p155, %p156
      %p159 = scmp.ne.s32.totalorder %s144, %s158
      %p160 = scmp.eq.s32.totalorder %s24, 0
      %p161 = por %p159, %p160
      %p162 = scmp.le.s32.totalorder 1, %s18
      %p163 = scmp.lt.s32.totalorder %s18, 4
      %p164 = pnand %p162, %p163
      %p165 = pneg %p164
      // Predicated region
      $region9: #{sp_gnn_stage.1} parent=5 // pred_check
        _
      $region10: #{sp_gnn_stage.1} parent=5 // pred_check_branch
        %167 = sbr.rel (%p164) target = $region12
      $region11: #{sp_gnn_stage.1} parent=5 // pred_region
        %s168 = ssub.s32 %s18, 1
        // Predicated region
        $region13: #{sp_gnn_stage.1} parent=11 // pred_check
          %p169 = pneg %p39
        $region14: #{sp_gnn_stage.1} parent=11 // pred_check_branch
          %171 = sbr.rel (%p169) target = $region16
        $region15: #{sp_gnn_stage.1} parent=11 // pred_region
          %s173 = ssub.s32 64, 64
          %174 = vsyncadd [#allocation6], %s173
          %177 = dma.hbm_to_smem %s0, 64, [#allocation3], [#allocation6]
        $region16: #{sp_gnn_stage.1} parent=11 // pred_fallthru
          _
        // Predicated region
        $region17: #{sp_gnn_stage.1} parent=11 // pred_check
          %p178 = pneg %p60
        $region18: #{sp_gnn_stage.1} parent=11 // pred_check_branch
          %180 = sbr.rel (%p178) target = $region20
        $region19: #{sp_gnn_stage.1} parent=11 // pred_region
          %s182 = ssub.s32 2048, 2048
          %183 = vsyncadd [#allocation4], %s182
          %s184 = sshll.u32 [#allocation7], 4
          %s185 = int_to_ptr.vmem [resolvable:$true] %s184
          %190 = dma.hbm_to_vmem [thread:$0]  %s1, 2048, %s185, [#allocation4], 128, 128, 8
        $region20: #{sp_gnn_stage.1} parent=11 // pred_fallthru
          _
        // Predicated region
        $region21: #{sp_gnn_stage.1} parent=11 // pred_check
          %p191 = pneg %p133
        $region22: #{sp_gnn_stage.1} parent=11 // pred_check_branch
          %193 = sbr.rel (%p191) target = $region24
        $region23: #{sp_gnn_stage.1} parent=11 // pred_region
          %s195 = ssub.s32 3072, 3072
          %196 = vsyncadd [#allocation12], %s195
          %s197 = sshll.u32 [#allocation11], 4
          %s198 = int_to_ptr.vmem [resolvable:$true] %s197
          %203 = dma.hbm_to_vmem [thread:$0]  %s4, 3072, %s198, [#allocation12], 64, 64, 4
        $region24: #{sp_gnn_stage.1} parent=11 // pred_fallthru
          _
      $region12: #{sp_gnn_stage.1} parent=5 // pred_fallthru
        _
      %p204 = scmp.lt.s32.totalorder %s18, 3
      // Predicated region
      $region25: #{sp_gnn_stage.1} parent=5 // pred_check
        %p205 = pneg %p204
      $region26: #{sp_gnn_stage.1} parent=5 // pred_check_branch
        %207 = sbr.rel (%p205) target = $region28
      $region27: #{sp_gnn_stage.1} parent=5 // pred_region
        // Predicated region
        $region29: #{sp_gnn_stage.1} parent=27 // pred_check
          %p208 = pneg %p80
        $region30: #{sp_gnn_stage.1} parent=27 // pred_check_branch
          %210 = sbr.rel (%p208) target = $region32
        $region31: #{sp_gnn_stage.1} parent=27 // pred_region
          %s211 = sand.u32 %s18, 1
          %s212 = scalar_lea.sflag [#allocation9], %s211
          %s213 = sand.u32 %s70, 1
          %s214 = smul.addr %s213, 64
          %s215 = scalar_lea.vmem [#allocation8], %s214
          %s217 = ssub.s32 1024, 1024
          %218 = vsyncadd %s212, %s217
          %s219 = smul.addr %s18, 16
          %s220 = smul.addr %s219, 64
          %s221 = scalar_lea.hbm %s2, %s220
          %s222 = sshll.u32 %s215, 4
          %s223 = int_to_ptr.vmem [resolvable:$true] %s222
          %228 = dma.hbm_to_vmem [thread:$0]  %s221, 1024, %s223, %s212, 64, 64, 4
        $region32: #{sp_gnn_stage.1} parent=27 // pred_fallthru
          _
        // Predicated region
        $region33: #{sp_gnn_stage.1} parent=27 // pred_check
          %p229 = pneg %p106
        $region34: #{sp_gnn_stage.1} parent=27 // pred_check_branch
          %231 = sbr.rel (%p229) target = $region36
        $region35: #{sp_gnn_stage.1} parent=27 // pred_region
          %s232 = sand.u32 %s18, 1
          %s233 = scalar_lea.sflag [#allocation9], %s232
          %s234 = sand.u32 %s96, 1
          %s235 = scalar_lea.vmem [#allocation10], %s234
          %s237 = ssub.s32 16, 16
          %238 = vsyncadd %s233, %s237
          %s239 = smul.addr %s18, 16
          %s240 = scalar_lea.hbm %s3, %s239
          %s242 = sshll.u32 %s235, 4
          %s243 = int_to_ptr.vmem [resolvable:$true] %s242
          %245 = dma.hbm_to_vmem [thread:$0]  %s240, 16, %s243, %s233
        $region36: #{sp_gnn_stage.1} parent=27 // pred_fallthru
          _
      $region28: #{sp_gnn_stage.1} parent=5 // pred_fallthru
        _
      %p246 = scmp.le.s32.totalorder 1, %s18
      %p247 = scmp.lt.s32.totalorder %s18, 4
      %p248 = pnand %p246, %p247
      %p249 = pneg %p248
      // Predicated region
      $region37: #{sp_gnn_stage.1} parent=5 // pred_check
        _
      $region38: #{sp_gnn_stage.1} parent=5 // pred_check_branch
        %251 = sbr.rel (%p248) target = $region40
      $region39: #{sp_gnn_stage.1} parent=5 // pred_region
        %s252 = ssub.s32 %s18, 1
        // Predicated region
        $region41: #{sp_gnn_stage.1} parent=39 // pred_check
          %p253 = pneg %p39
        $region42: #{sp_gnn_stage.1} parent=39 // pred_check_branch
          %255 = sbr.rel (%p253) target = $region44
        $region43: #{sp_gnn_stage.1} parent=39 // pred_region
          %256 = dma.done [#allocation6], 64
        $region44: #{sp_gnn_stage.1} parent=39 // pred_fallthru
          _
        // Predicated region
        $region45: #{sp_gnn_stage.1} parent=39 // pred_check
          %p257 = pneg %p60
        $region46: #{sp_gnn_stage.1} parent=39 // pred_check_branch
          %259 = sbr.rel (%p257) target = $region48
        $region47: #{sp_gnn_stage.1} parent=39 // pred_region
          %260 = dma.done [#allocation4], 2048
        $region48: #{sp_gnn_stage.1} parent=39 // pred_fallthru
          _
        %s261 = sand.u32 %s23, 1
        %s262 = scalar_lea.sflag [#allocation9], %s261
        %s263 = sand.u32 %s73, 1
        %s264 = smul.addr %s263, 64
        %s265 = scalar_lea.vmem [#allocation8], %s264
        // Predicated region
        $region49: #{sp_gnn_stage.1} parent=39 // pred_check
          %p266 = pneg %p86
        $region50: #{sp_gnn_stage.1} parent=39 // pred_check_branch
          %268 = sbr.rel (%p266) target = $region52
        $region51: #{sp_gnn_stage.1} parent=39 // pred_region
          %269 = dma.done %s262, 1024
        $region52: #{sp_gnn_stage.1} parent=39 // pred_fallthru
          _
        %s270 = sand.u32 %s23, 1
        %s271 = scalar_lea.sflag [#allocation9], %s270
        %s272 = sand.u32 %s99, 1
        %s273 = scalar_lea.vmem [#allocation10], %s272
        // Predicated region
        $region53: #{sp_gnn_stage.1} parent=39 // pred_check
          %p274 = pneg %p112
        $region54: #{sp_gnn_stage.1} parent=39 // pred_check_branch
          %276 = sbr.rel (%p274) target = $region56
        $region55: #{sp_gnn_stage.1} parent=39 // pred_region
          %277 = dma.done %s271, 16
        $region56: #{sp_gnn_stage.1} parent=39 // pred_fallthru
          _
        // Predicated region
        $region57: #{sp_gnn_stage.1} parent=39 // pred_check
          %p278 = pneg %p133
        $region58: #{sp_gnn_stage.1} parent=39 // pred_check_branch
          %280 = sbr.rel (%p278) target = $region60
        $region59: #{sp_gnn_stage.1} parent=39 // pred_region
          %281 = dma.done [#allocation12], 3072
        $region60: #{sp_gnn_stage.1} parent=39 // pred_fallthru
          _
        %282 = sfence
        %p283 = pneg %p39
        %p284 = pneg %p36
        %p285 = pneg %p60
        %p286 = pneg %p57
        %s287 = sand.u32 %s23, 1
        %s288 = scalar_lea.sflag [#allocation9], %s287
        %s289 = sand.u32 %s73, 1
        %s290 = smul.addr %s289, 64
        %s291 = scalar_lea.vmem [#allocation8], %s290
        %p292 = pneg %p86
        %p293 = pneg %p83
        %s294 = sand.u32 %s23, 1
        %s295 = scalar_lea.sflag [#allocation9], %s294
        %s296 = sand.u32 %s99, 1
        %s297 = scalar_lea.vmem [#allocation10], %s296
        %p298 = pneg %p112
        %p299 = pneg %p109
        %p300 = pneg %p133
        %p301 = pneg %p130
        %p302 = pneg %p154
        %p303 = pneg %p151
        %p305 = scmp.eq.s32.totalorder %s23, 0
        // Predicated region
        $region61: #{sp_gnn_stage.1} parent=39 // pred_check
          %p306 = pneg %p305
        $region62: #{sp_gnn_stage.1} parent=39 // pred_check_branch
          %308 = sbr.rel (%p306) target = $region64
        $region63: #{sp_gnn_stage.1} parent=39 // pred_region
          %v309 = vld [vmem:[#allocation7] sm:$0xff]
          %v310 = vld [vmem:[#allocation7 + $0x8] sm:$0xff]
          %v311 = vld [vmem:[#allocation7 + $0x10] sm:$0xff]
          %v312 = vld [vmem:[#allocation7 + $0x18] sm:$0xff]
          %v313 = vld [vmem:[#allocation7 + $0x20] sm:$0xff]
          %v314 = vld [vmem:[#allocation7 + $0x28] sm:$0xff]
          %v315 = vld [vmem:[#allocation7 + $0x30] sm:$0xff]
          %v316 = vld [vmem:[#allocation7 + $0x38] sm:$0xff]
          %v317 = vld [vmem:[#allocation7 + $0x40] sm:$0xff]
          %v318 = vld [vmem:[#allocation7 + $0x48] sm:$0xff]
          %v319 = vld [vmem:[#allocation7 + $0x50] sm:$0xff]
          %v320 = vld [vmem:[#allocation7 + $0x58] sm:$0xff]
          %v321 = vld [vmem:[#allocation7 + $0x60] sm:$0xff]
          %v322 = vld [vmem:[#allocation7 + $0x68] sm:$0xff]
          %v323 = vld [vmem:[#allocation7 + $0x70] sm:$0xff]
          %v324 = vld [vmem:[#allocation7 + $0x78] sm:$0xff]
          %325 = vst [vmem:[#allocation2] sm:$0xff] %v309
          %326 = vst [vmem:[#allocation2 + $0x8] sm:$0xff] %v310
          %327 = vst [vmem:[#allocation2 + $0x10] sm:$0xff] %v311
          %328 = vst [vmem:[#allocation2 + $0x18] sm:$0xff] %v312
          %329 = vst [vmem:[#allocation2 + $0x20] sm:$0xff] %v313
          %330 = vst [vmem:[#allocation2 + $0x28] sm:$0xff] %v314
          %331 = vst [vmem:[#allocation2 + $0x30] sm:$0xff] %v315
          %332 = vst [vmem:[#allocation2 + $0x38] sm:$0xff] %v316
          %333 = vst [vmem:[#allocation2 + $0x40] sm:$0xff] %v317
          %334 = vst [vmem:[#allocation2 + $0x48] sm:$0xff] %v318
          %335 = vst [vmem:[#allocation2 + $0x50] sm:$0xff] %v319
          %336 = vst [vmem:[#allocation2 + $0x58] sm:$0xff] %v320
          %337 = vst [vmem:[#allocation2 + $0x60] sm:$0xff] %v321
          %338 = vst [vmem:[#allocation2 + $0x68] sm:$0xff] %v322
          %339 = vst [vmem:[#allocation2 + $0x70] sm:$0xff] %v323
          %340 = vst [vmem:[#allocation2 + $0x78] sm:$0xff] %v324
        $region64: #{sp_gnn_stage.1} parent=39 // pred_fallthru
          _
        %v341 = vld [vmem:[#allocation2] sm:$0xff]
        %v342 = vld [vmem:[#allocation2 + $0x8] sm:$0xff]
        %v343 = vld [vmem:[#allocation2 + $0x10] sm:$0xff]
        %v344 = vld [vmem:[#allocation2 + $0x18] sm:$0xff]
        %v345 = vld [vmem:[#allocation2 + $0x20] sm:$0xff]
        %v346 = vld [vmem:[#allocation2 + $0x28] sm:$0xff]
        %v347 = vld [vmem:[#allocation2 + $0x30] sm:$0xff]
        %v348 = vld [vmem:[#allocation2 + $0x38] sm:$0xff]
        %v349 = vld [vmem:[#allocation2 + $0x40] sm:$0xff]
        %v350 = vld [vmem:[#allocation2 + $0x48] sm:$0xff]
        %v351 = vld [vmem:[#allocation2 + $0x50] sm:$0xff]
        %v352 = vld [vmem:[#allocation2 + $0x58] sm:$0xff]
        %v353 = vld [vmem:[#allocation2 + $0x60] sm:$0xff]
        %v354 = vld [vmem:[#allocation2 + $0x68] sm:$0xff]
        %v355 = vld [vmem:[#allocation2 + $0x70] sm:$0xff]
        %v356 = vld [vmem:[#allocation2 + $0x78] sm:$0xff]
        %v357 = vpack.c.bf16 %v342, %v341
        %v358 = vpack.c.bf16 %v344, %v343
        %v359 = vpack.c.bf16 %v346, %v345
        %v360 = vpack.c.bf16 %v348, %v347
        %v361 = vpack.c.bf16 %v350, %v349
        %v362 = vpack.c.bf16 %v352, %v351
        %v363 = vpack.c.bf16 %v354, %v353
        %v364 = vpack.c.bf16 %v356, %v355
        %v365 = vld [vmem:[%s265] sm:$0xf]
        %v366 = vld [vmem:[%s265 + $0x4] sm:$0xf]
        %v367 = vld [vmem:[%s265 + $0x8] sm:$0xf]
        %v368 = vld [vmem:[%s265 + $0xc] sm:$0xf]
        %v369 = vld [vmem:[%s265 + $0x10] sm:$0xf]
        %v370 = vld [vmem:[%s265 + $0x14] sm:$0xf]
        %v371 = vld [vmem:[%s265 + $0x18] sm:$0xf]
        %v372 = vld [vmem:[%s265 + $0x1c] sm:$0xf]
        %v373 = vld [vmem:[%s265 + $0x20] sm:$0xf]
        %v374 = vld [vmem:[%s265 + $0x24] sm:$0xf]
        %v375 = vld [vmem:[%s265 + $0x28] sm:$0xf]
        %v376 = vld [vmem:[%s265 + $0x2c] sm:$0xf]
        %v377 = vld [vmem:[%s265 + $0x30] sm:$0xf]
        %v378 = vld [vmem:[%s265 + $0x34] sm:$0xf]
        %v379 = vld [vmem:[%s265 + $0x38] sm:$0xf]
        %v380 = vld [vmem:[%s265 + $0x3c] sm:$0xf]
        %v381 = vld [vmem:[%s273] sm:$0x1]
        %v383 = vlaneseq
        %v384 = vshrl.u32 %v383, 7
        %v385 = vsub.s32 0, %v384
        %v386 = vrot.slane %v381, %v385
        %v404 = vunpack.c.l.b16 %v365
        %v405 = vunpack.c.l.b16 %v366
        %v406 = vunpack.c.l.b16 %v367
        %v407 = vunpack.c.l.b16 %v368
        %v408 = vunpack.c.l.b16 %v369
        %v409 = vunpack.c.l.b16 %v370
        %v410 = vunpack.c.l.b16 %v371
        %v411 = vunpack.c.l.b16 %v372
        %v412 = vunpack.c.l.b16 %v373
        %v413 = vunpack.c.l.b16 %v374
        %v414 = vunpack.c.l.b16 %v375
        %v415 = vunpack.c.l.b16 %v376
        %v416 = vunpack.c.l.b16 %v377
        %v417 = vunpack.c.l.b16 %v378
        %v418 = vunpack.c.l.b16 %v379
        %v419 = vunpack.c.l.b16 %v380
        %v420 = vpack.c.b16 %v405, %v404
        %v421 = vpack.c.b16 %v407, %v406
        %v422 = vpack.c.b16 %v409, %v408
        %v423 = vpack.c.b16 %v411, %v410
        %v424 = vpack.c.b16 %v413, %v412
        %v425 = vpack.c.b16 %v415, %v414
        %v426 = vpack.c.b16 %v417, %v416
        %v427 = vpack.c.b16 %v419, %v418
        %436 = vmatprep.subr.bf16.mxu0 0
        %437 = vmatpush1.bf16.msra.mxu0 %v420
        %438 = vmatprep.subr.bf16.mxu0 0
        %439 = vmatpush1.bf16.msra.mxu0 %v421
        %440 = vmatprep.subr.bf16.mxu0 0
        %441 = vmatpush1.bf16.msra.mxu0 %v422
        %442 = vmatprep.subr.bf16.mxu0 0
        %443 = vmatpush1.bf16.msra.mxu0 %v423
        %444 = vmatprep.subr.bf16.mxu0 0
        %445 = vmatpush1.bf16.msra.mxu0 %v424
        %446 = vmatprep.subr.bf16.mxu0 0
        %447 = vmatpush1.bf16.msra.mxu0 %v425
        %448 = vmatprep.subr.bf16.mxu0 0
        %449 = vmatpush1.bf16.msra.mxu0 %v426
        %450 = vmatprep.subr.bf16.mxu0 0
        %451 = vmatpush1.bf16.msra.mxu0 %v427
        %452 = vmatprep.subr.bf16.mxu0 0
        %453 = vmatpush1.bf16.msra.mxu0 0
        %454 = vmatprep.subr.bf16.mxu0 0
        %455 = vmatpush1.bf16.msra.mxu0 0
        %456 = vmatprep.subr.bf16.mxu0 0
        %457 = vmatpush1.bf16.msra.mxu0 0
        %458 = vmatprep.subr.bf16.mxu0 0
        %459 = vmatpush1.bf16.msra.mxu0 0
        %460 = vmatprep.subr.bf16.mxu0 0
        %461 = vmatpush1.bf16.msra.mxu0 0
        %462 = vmatprep.subr.bf16.mxu0 0
        %463 = vmatpush1.bf16.msra.mxu0 0
        %464 = vmatprep.subr.bf16.mxu0 0
        %465 = vmatpush1.bf16.msra.mxu0 0
        %466 = vmatprep.subr.bf16.mxu0 0
        %467 = vmatpush1.bf16.msra.mxu0 0
        %468 = vmatprep.mubr.bf16.mxu0 0
        %469 = vmatmul.mubr.bf16.gmra.mrb[0].mxu0 %v357
        %v470 = vpop.f32.mrb[0].mxu0
        %v471 = vadd.f32 %v386, %v470
        %v472 = vpop.f32.mrb[0].mxu0
        %v473 = vpop.f32.mrb[0].mxu0
        %v474 = vadd.f32 %v386, %v473
        %v475 = vpop.f32.mrb[0].mxu0
        %476 = vmatprep.mubr.bf16.mxu0 0
        %477 = vmatmul.mubr.bf16.gmra.mrb[0].mxu0 %v358
        %v478 = vpop.f32.mrb[0].mxu0
        %v479 = vadd.f32 %v386, %v478
        %v480 = vpop.f32.mrb[0].mxu0
        %v481 = vpop.f32.mrb[0].mxu0
        %v482 = vadd.f32 %v386, %v481
        %v483 = vpop.f32.mrb[0].mxu0
        %484 = vmatprep.mubr.bf16.mxu0 0
        %485 = vmatmul.mubr.bf16.gmra.mrb[0].mxu0 %v359
        %v486 = vpop.f32.mrb[0].mxu0
        %v487 = vadd.f32 %v386, %v486
        %v488 = vpop.f32.mrb[0].mxu0
        %v489 = vpop.f32.mrb[0].mxu0
        %v490 = vadd.f32 %v386, %v489
        %v491 = vpop.f32.mrb[0].mxu0
        %492 = vmatprep.mubr.bf16.mxu0 0
        %493 = vmatmul.mubr.bf16.gmra.mrb[0].mxu0 %v360
        %v494 = vpop.f32.mrb[0].mxu0
        %v495 = vadd.f32 %v386, %v494
        %v496 = vpop.f32.mrb[0].mxu0
        %v497 = vpop.f32.mrb[0].mxu0
        %v498 = vadd.f32 %v386, %v497
        %v499 = vpop.f32.mrb[0].mxu0
        %500 = vmatprep.mubr.bf16.mxu0 0
        %501 = vmatmul.mubr.bf16.gmra.mrb[0].mxu0 %v361
        %v502 = vpop.f32.mrb[0].mxu0
        %v503 = vadd.f32 %v386, %v502
        %v504 = vpop.f32.mrb[0].mxu0
        %v505 = vpop.f32.mrb[0].mxu0
        %v506 = vadd.f32 %v386, %v505
        %v507 = vpop.f32.mrb[0].mxu0
        %508 = vmatprep.mubr.bf16.mxu0 0
        %509 = vmatmul.mubr.bf16.gmra.mrb[0].mxu0 %v362
        %v510 = vpop.f32.mrb[0].mxu0
        %v511 = vadd.f32 %v386, %v510
        %v512 = vpop.f32.mrb[0].mxu0
        %v513 = vpop.f32.mrb[0].mxu0
        %v514 = vadd.f32 %v386, %v513
        %v515 = vpop.f32.mrb[0].mxu0
        %516 = vmatprep.mubr.bf16.mxu0 0
        %517 = vmatmul.mubr.bf16.gmra.mrb[0].mxu0 %v363
        %v518 = vpop.f32.mrb[0].mxu0
        %v519 = vadd.f32 %v386, %v518
        %v520 = vpop.f32.mrb[0].mxu0
        %v521 = vpop.f32.mrb[0].mxu0
        %v522 = vadd.f32 %v386, %v521
        %v523 = vpop.f32.mrb[0].mxu0
        %524 = vmatprep.mubr.bf16.mxu0 0
        %525 = vmatmul.mubr.bf16.gmra.mrb[0].mxu0 %v364
        %v526 = vpop.f32.mrb[0].mxu0
        %v527 = vadd.f32 %v386, %v526
        %v528 = vpop.f32.mrb[0].mxu0
        %v529 = vpop.f32.mrb[0].mxu0
        %v530 = vadd.f32 %v386, %v529
        %v531 = vpop.f32.mrb[0].mxu0
        %532 = vdwg.mxu0
        %v533 = vpack.c.bf16 %v474, %v471
        %v534 = vpack.c.bf16 %v482, %v479
        %v535 = vpack.c.bf16 %v490, %v487
        %v536 = vpack.c.bf16 %v498, %v495
        %v537 = vpack.c.bf16 %v506, %v503
        %v538 = vpack.c.bf16 %v514, %v511
        %v539 = vpack.c.bf16 %v522, %v519
        %v540 = vpack.c.bf16 %v530, %v527
        %v541 = vld [vmem:[#allocation11] sm:$0xf]
        %v542 = vld [vmem:[#allocation11 + $0x4] sm:$0xf]
        %v543 = vld [vmem:[#allocation11 + $0x8] sm:$0xf]
        %v544 = vld [vmem:[#allocation11 + $0xc] sm:$0xf]
        %v545 = vld [vmem:[#allocation11 + $0x10] sm:$0xf]
        %v546 = vld [vmem:[#allocation11 + $0x14] sm:$0xf]
        %v547 = vld [vmem:[#allocation11 + $0x18] sm:$0xf]
        %v548 = vld [vmem:[#allocation11 + $0x1c] sm:$0xf]
        %v549 = vld [vmem:[#allocation11 + $0x20] sm:$0xf]
        %v550 = vld [vmem:[#allocation11 + $0x24] sm:$0xf]
        %v551 = vld [vmem:[#allocation11 + $0x28] sm:$0xf]
        %v552 = vld [vmem:[#allocation11 + $0x2c] sm:$0xf]
        %v553 = vld [vmem:[#allocation11 + $0x30] sm:$0xf]
        %v554 = vld [vmem:[#allocation11 + $0x34] sm:$0xf]
        %v555 = vld [vmem:[#allocation11 + $0x38] sm:$0xf]
        %v556 = vld [vmem:[#allocation11 + $0x3c] sm:$0xf]
        %v573 = vunpack.c.l.b16 %v541
        %v574 = vunpack.c.l.b16 %v542
        %v575 = vunpack.c.l.b16 %v543
        %v576 = vunpack.c.l.b16 %v544
        %v577 = vunpack.c.l.b16 %v545
        %v578 = vunpack.c.l.b16 %v546
        %v579 = vunpack.c.l.b16 %v547
        %v580 = vunpack.c.l.b16 %v548
        %v581 = vunpack.c.l.b16 %v549
        %v582 = vunpack.c.l.b16 %v550
        %v583 = vunpack.c.l.b16 %v551
        %v584 = vunpack.c.l.b16 %v552
        %v585 = vunpack.c.l.b16 %v553
        %v586 = vunpack.c.l.b16 %v554
        %v587 = vunpack.c.l.b16 %v555
        %v588 = vunpack.c.l.b16 %v556
        %v589 = vpack.c.b16 %v574, %v573
        %v590 = vpack.c.b16 %v576, %v575
        %v591 = vpack.c.b16 %v578, %v577
        %v592 = vpack.c.b16 %v580, %v579
        %v593 = vpack.c.b16 %v582, %v581
        %v594 = vpack.c.b16 %v584, %v583
        %v595 = vpack.c.b16 %v586, %v585
        %v596 = vpack.c.b16 %v588, %v587
        %605 = vmatprep.subr.bf16.mxu0 0
        %606 = vmatpush1.bf16.msra.mxu0 %v533
        %607 = vmatprep.subr.bf16.mxu0 0
        %608 = vmatpush1.bf16.msra.mxu0 %v534
        %609 = vmatprep.subr.bf16.mxu0 0
        %610 = vmatpush1.bf16.msra.mxu0 %v535
        %611 = vmatprep.subr.bf16.mxu0 0
        %612 = vmatpush1.bf16.msra.mxu0 %v536
        %613 = vmatprep.subr.bf16.mxu0 0
        %614 = vmatpush1.bf16.msra.mxu0 %v537
        %615 = vmatprep.subr.bf16.mxu0 0
        %616 = vmatpush1.bf16.msra.mxu0 %v538
        %617 = vmatprep.subr.bf16.mxu0 0
        %618 = vmatpush1.bf16.msra.mxu0 %v539
        %619 = vmatprep.subr.bf16.mxu0 0
        %620 = vmatpush1.bf16.msra.mxu0 %v540
        %621 = vmatprep.subr.bf16.mxu0 0
        %622 = vmatpush1.bf16.msra.mxu0 0
        %623 = vmatprep.subr.bf16.mxu0 0
        %624 = vmatpush1.bf16.msra.mxu0 0
        %625 = vmatprep.subr.bf16.mxu0 0
        %626 = vmatpush1.bf16.msra.mxu0 0
        %627 = vmatprep.subr.bf16.mxu0 0
        %628 = vmatpush1.bf16.msra.mxu0 0
        %629 = vmatprep.subr.bf16.mxu0 0
        %630 = vmatpush1.bf16.msra.mxu0 0
        %631 = vmatprep.subr.bf16.mxu0 0
        %632 = vmatpush1.bf16.msra.mxu0 0
        %633 = vmatprep.subr.bf16.mxu0 0
        %634 = vmatpush1.bf16.msra.mxu0 0
        %635 = vmatprep.subr.bf16.mxu0 0
        %636 = vmatpush1.bf16.msra.mxu0 0
        %637 = vmatprep.mubr.bf16.mxu0 0
        %638 = vmatmul.mubr.bf16.gmra.mrb[0].mxu0 %v589
        %v639 = vpop.f32.mrb[0].mxu0
        %v640 = vadd.f32 0.0, %v639
        %v641 = vpop.f32.mrb[0].mxu0
        %v642 = vpop.f32.mrb[0].mxu0
        %v643 = vadd.f32 0.0, %v642
        %v644 = vpop.f32.mrb[0].mxu0
        %645 = vmatprep.mubr.bf16.mxu0 0
        %646 = vmatmul.mubr.bf16.gmra.mrb[0].mxu0 %v590
        %v647 = vpop.f32.mrb[0].mxu0
        %v648 = vadd.f32 0.0, %v647
        %v649 = vpop.f32.mrb[0].mxu0
        %v650 = vpop.f32.mrb[0].mxu0
        %v651 = vadd.f32 0.0, %v650
        %v652 = vpop.f32.mrb[0].mxu0
        %653 = vmatprep.mubr.bf16.mxu0 0
        %654 = vmatmul.mubr.bf16.gmra.mrb[0].mxu0 %v591
        %v655 = vpop.f32.mrb[0].mxu0
        %v656 = vadd.f32 0.0, %v655
        %v657 = vpop.f32.mrb[0].mxu0
        %v658 = vpop.f32.mrb[0].mxu0
        %v659 = vadd.f32 0.0, %v658
        %v660 = vpop.f32.mrb[0].mxu0
        %661 = vmatprep.mubr.bf16.mxu0 0
        %662 = vmatmul.mubr.bf16.gmra.mrb[0].mxu0 %v592
        %v663 = vpop.f32.mrb[0].mxu0
        %v664 = vadd.f32 0.0, %v663
        %v665 = vpop.f32.mrb[0].mxu0
        %v666 = vpop.f32.mrb[0].mxu0
        %v667 = vadd.f32 0.0, %v666
        %v668 = vpop.f32.mrb[0].mxu0
        %669 = vmatprep.mubr.bf16.mxu0 0
        %670 = vmatmul.mubr.bf16.gmra.mrb[0].mxu0 %v593
        %v671 = vpop.f32.mrb[0].mxu0
        %v672 = vadd.f32 0.0, %v671
        %v673 = vpop.f32.mrb[0].mxu0
        %v674 = vpop.f32.mrb[0].mxu0
        %v675 = vadd.f32 0.0, %v674
        %v676 = vpop.f32.mrb[0].mxu0
        %677 = vmatprep.mubr.bf16.mxu0 0
        %678 = vmatmul.mubr.bf16.gmra.mrb[0].mxu0 %v594
        %v679 = vpop.f32.mrb[0].mxu0
        %v680 = vadd.f32 0.0, %v679
        %v681 = vpop.f32.mrb[0].mxu0
        %v682 = vpop.f32.mrb[0].mxu0
        %v683 = vadd.f32 0.0, %v682
        %v684 = vpop.f32.mrb[0].mxu0
        %685 = vmatprep.mubr.bf16.mxu0 0
        %686 = vmatmul.mubr.bf16.gmra.mrb[0].mxu0 %v595
        %v687 = vpop.f32.mrb[0].mxu0
        %v688 = vadd.f32 0.0, %v687
        %v689 = vpop.f32.mrb[0].mxu0
        %v690 = vpop.f32.mrb[0].mxu0
        %v691 = vadd.f32 0.0, %v690
        %v692 = vpop.f32.mrb[0].mxu0
        %693 = vmatprep.mubr.bf16.mxu0 0
        %694 = vmatmul.mubr.bf16.gmra.mrb[0].mxu0 %v596
        %v695 = vpop.f32.mrb[0].mxu0
        %v696 = vadd.f32 0.0, %v695
        %v697 = vpop.f32.mrb[0].mxu0
        %v698 = vpop.f32.mrb[0].mxu0
        %v699 = vadd.f32 0.0, %v698
        %v700 = vpop.f32.mrb[0].mxu0
        %701 = vdwg.mxu0
        %s702 = smul.u32 %s23, 128
        %s703 = sld [smem:[#allocation3 + %s702]]
        %v704 = vstv %s703
        %v705 = vmul.f32 %v640, %v704
        %v706 = vmul.f32 %v643, %v704
        %v707 = vmul.f32 %v648, %v704
        %v708 = vmul.f32 %v651, %v704
        %v709 = vmul.f32 %v656, %v704
        %v710 = vmul.f32 %v659, %v704
        %v711 = vmul.f32 %v664, %v704
        %v712 = vmul.f32 %v667, %v704
        %v713 = vmul.f32 %v672, %v704
        %v714 = vmul.f32 %v675, %v704
        %v715 = vmul.f32 %v680, %v704
        %v716 = vmul.f32 %v683, %v704
        %v717 = vmul.f32 %v688, %v704
        %v718 = vmul.f32 %v691, %v704
        %v719 = vmul.f32 %v696, %v704
        %v720 = vmul.f32 %v699, %v704
        %s721 = scalar_lea.vmem [#allocation11], 64
        %v722 = vld [vmem:[%s721] sm:$0xf]
        %v723 = vld [vmem:[%s721 + $0x4] sm:$0xf]
        %v724 = vld [vmem:[%s721 + $0x8] sm:$0xf]
        %v725 = vld [vmem:[%s721 + $0xc] sm:$0xf]
        %v726 = vld [vmem:[%s721 + $0x10] sm:$0xf]
        %v727 = vld [vmem:[%s721 + $0x14] sm:$0xf]
        %v728 = vld [vmem:[%s721 + $0x18] sm:$0xf]
        %v729 = vld [vmem:[%s721 + $0x1c] sm:$0xf]
        %v730 = vld [vmem:[%s721 + $0x20] sm:$0xf]
        %v731 = vld [vmem:[%s721 + $0x24] sm:$0xf]
        %v732 = vld [vmem:[%s721 + $0x28] sm:$0xf]
        %v733 = vld [vmem:[%s721 + $0x2c] sm:$0xf]
        %v734 = vld [vmem:[%s721 + $0x30] sm:$0xf]
        %v735 = vld [vmem:[%s721 + $0x34] sm:$0xf]
        %v736 = vld [vmem:[%s721 + $0x38] sm:$0xf]
        %v737 = vld [vmem:[%s721 + $0x3c] sm:$0xf]
        %v754 = vunpack.c.l.b16 %v722
        %v755 = vunpack.c.l.b16 %v723
        %v756 = vunpack.c.l.b16 %v724
        %v757 = vunpack.c.l.b16 %v725
        %v758 = vunpack.c.l.b16 %v726
        %v759 = vunpack.c.l.b16 %v727
        %v760 = vunpack.c.l.b16 %v728
        %v761 = vunpack.c.l.b16 %v729
        %v762 = vunpack.c.l.b16 %v730
        %v763 = vunpack.c.l.b16 %v731
        %v764 = vunpack.c.l.b16 %v732
        %v765 = vunpack.c.l.b16 %v733
        %v766 = vunpack.c.l.b16 %v734
        %v767 = vunpack.c.l.b16 %v735
        %v768 = vunpack.c.l.b16 %v736
        %v769 = vunpack.c.l.b16 %v737
        %v770 = vpack.c.b16 %v755, %v754
        %v771 = vpack.c.b16 %v757, %v756
        %v772 = vpack.c.b16 %v759, %v758
        %v773 = vpack.c.b16 %v761, %v760
        %v774 = vpack.c.b16 %v763, %v762
        %v775 = vpack.c.b16 %v765, %v764
        %v776 = vpack.c.b16 %v767, %v766
        %v777 = vpack.c.b16 %v769, %v768
        %786 = vmatprep.subr.bf16.mxu0 0
        %787 = vmatpush1.bf16.msra.mxu0 %v533
        %788 = vmatprep.subr.bf16.mxu0 0
        %789 = vmatpush1.bf16.msra.mxu0 %v534
        %790 = vmatprep.subr.bf16.mxu0 0
        %791 = vmatpush1.bf16.msra.mxu0 %v535
        %792 = vmatprep.subr.bf16.mxu0 0
        %793 = vmatpush1.bf16.msra.mxu0 %v536
        %794 = vmatprep.subr.bf16.mxu0 0
        %795 = vmatpush1.bf16.msra.mxu0 %v537
        %796 = vmatprep.subr.bf16.mxu0 0
        %797 = vmatpush1.bf16.msra.mxu0 %v538
        %798 = vmatprep.subr.bf16.mxu0 0
        %799 = vmatpush1.bf16.msra.mxu0 %v539
        %800 = vmatprep.subr.bf16.mxu0 0
        %801 = vmatpush1.bf16.msra.mxu0 %v540
        %802 = vmatprep.subr.bf16.mxu0 0
        %803 = vmatpush1.bf16.msra.mxu0 0
        %804 = vmatprep.subr.bf16.mxu0 0
        %805 = vmatpush1.bf16.msra.mxu0 0
        %806 = vmatprep.subr.bf16.mxu0 0
        %807 = vmatpush1.bf16.msra.mxu0 0
        %808 = vmatprep.subr.bf16.mxu0 0
        %809 = vmatpush1.bf16.msra.mxu0 0
        %810 = vmatprep.subr.bf16.mxu0 0
        %811 = vmatpush1.bf16.msra.mxu0 0
        %812 = vmatprep.subr.bf16.mxu0 0
        %813 = vmatpush1.bf16.msra.mxu0 0
        %814 = vmatprep.subr.bf16.mxu0 0
        %815 = vmatpush1.bf16.msra.mxu0 0
        %816 = vmatprep.subr.bf16.mxu0 0
        %817 = vmatpush1.bf16.msra.mxu0 0
        %818 = vmatprep.mubr.bf16.mxu0 0
        %819 = vmatmul.mubr.bf16.gmra.mrb[0].mxu0 %v770
        %v820 = vpop.f32.mrb[0].mxu0
        %v821 = vadd.f32 0.0, %v820
        %v822 = vpop.f32.mrb[0].mxu0
        %v823 = vpop.f32.mrb[0].mxu0
        %v824 = vadd.f32 0.0, %v823
        %v825 = vpop.f32.mrb[0].mxu0
        %826 = vmatprep.mubr.bf16.mxu0 0
        %827 = vmatmul.mubr.bf16.gmra.mrb[0].mxu0 %v771
        %v828 = vpop.f32.mrb[0].mxu0
        %v829 = vadd.f32 0.0, %v828
        %v830 = vpop.f32.mrb[0].mxu0
        %v831 = vpop.f32.mrb[0].mxu0
        %v832 = vadd.f32 0.0, %v831
        %v833 = vpop.f32.mrb[0].mxu0
        %834 = vmatprep.mubr.bf16.mxu0 0
        %835 = vmatmul.mubr.bf16.gmra.mrb[0].mxu0 %v772
        %v836 = vpop.f32.mrb[0].mxu0
        %v837 = vadd.f32 0.0, %v836
        %v838 = vpop.f32.mrb[0].mxu0
        %v839 = vpop.f32.mrb[0].mxu0
        %v840 = vadd.f32 0.0, %v839
        %v841 = vpop.f32.mrb[0].mxu0
        %842 = vmatprep.mubr.bf16.mxu0 0
        %843 = vmatmul.mubr.bf16.gmra.mrb[0].mxu0 %v773
        %v844 = vpop.f32.mrb[0].mxu0
        %v845 = vadd.f32 0.0, %v844
        %v846 = vpop.f32.mrb[0].mxu0
        %v847 = vpop.f32.mrb[0].mxu0
        %v848 = vadd.f32 0.0, %v847
        %v849 = vpop.f32.mrb[0].mxu0
        %850 = vmatprep.mubr.bf16.mxu0 0
        %851 = vmatmul.mubr.bf16.gmra.mrb[0].mxu0 %v774
        %v852 = vpop.f32.mrb[0].mxu0
        %v853 = vadd.f32 0.0, %v852
        %v854 = vpop.f32.mrb[0].mxu0
        %v855 = vpop.f32.mrb[0].mxu0
        %v856 = vadd.f32 0.0, %v855
        %v857 = vpop.f32.mrb[0].mxu0
        %858 = vmatprep.mubr.bf16.mxu0 0
        %859 = vmatmul.mubr.bf16.gmra.mrb[0].mxu0 %v775
        %v860 = vpop.f32.mrb[0].mxu0
        %v861 = vadd.f32 0.0, %v860
        %v862 = vpop.f32.mrb[0].mxu0
        %v863 = vpop.f32.mrb[0].mxu0
        %v864 = vadd.f32 0.0, %v863
        %v865 = vpop.f32.mrb[0].mxu0
        %866 = vmatprep.mubr.bf16.mxu0 0
        %867 = vmatmul.mubr.bf16.gmra.mrb[0].mxu0 %v776
        %v868 = vpop.f32.mrb[0].mxu0
        %v869 = vadd.f32 0.0, %v868
        %v870 = vpop.f32.mrb[0].mxu0
        %v871 = vpop.f32.mrb[0].mxu0
        %v872 = vadd.f32 0.0, %v871
        %v873 = vpop.f32.mrb[0].mxu0
        %874 = vmatprep.mubr.bf16.mxu0 0
        %875 = vmatmul.mubr.bf16.gmra.mrb[0].mxu0 %v777
        %v876 = vpop.f32.mrb[0].mxu0
        %v877 = vadd.f32 0.0, %v876
        %v878 = vpop.f32.mrb[0].mxu0
        %v879 = vpop.f32.mrb[0].mxu0
        %v880 = vadd.f32 0.0, %v879
        %v881 = vpop.f32.mrb[0].mxu0
        %882 = vdwg.mxu0
        %s883 = sadd.s32 %s702, 1
        %s884 = sld [smem:[#allocation3 + %s883]]
        %v885 = vstv %s884
        %v886 = vmul.f32 %v821, %v885
        %v887 = vmul.f32 %v824, %v885
        %v888 = vmul.f32 %v829, %v885
        %v889 = vmul.f32 %v832, %v885
        %v890 = vmul.f32 %v837, %v885
        %v891 = vmul.f32 %v840, %v885
        %v892 = vmul.f32 %v845, %v885
        %v893 = vmul.f32 %v848, %v885
        %v894 = vmul.f32 %v853, %v885
        %v895 = vmul.f32 %v856, %v885
        %v896 = vmul.f32 %v861, %v885
        %v897 = vmul.f32 %v864, %v885
        %v898 = vmul.f32 %v869, %v885
        %v899 = vmul.f32 %v872, %v885
        %v900 = vmul.f32 %v877, %v885
        %v901 = vmul.f32 %v880, %v885
        %v902 = vadd.f32 %v705, %v886
        %v903 = vadd.f32 %v706, %v887
        %v904 = vadd.f32 %v707, %v888
        %v905 = vadd.f32 %v708, %v889
        %v906 = vadd.f32 %v709, %v890
        %v907 = vadd.f32 %v710, %v891
        %v908 = vadd.f32 %v711, %v892
        %v909 = vadd.f32 %v712, %v893
        %v910 = vadd.f32 %v713, %v894
        %v911 = vadd.f32 %v714, %v895
        %v912 = vadd.f32 %v715, %v896
        %v913 = vadd.f32 %v716, %v897
        %v914 = vadd.f32 %v717, %v898
        %v915 = vadd.f32 %v718, %v899
        %v916 = vadd.f32 %v719, %v900
        %v917 = vadd.f32 %v720, %v901
        %s918 = scalar_lea.vmem [#allocation11], 128
        %v919 = vld [vmem:[%s918] sm:$0xf]
        %v920 = vld [vmem:[%s918 + $0x4] sm:$0xf]
        %v921 = vld [vmem:[%s918 + $0x8] sm:$0xf]
        %v922 = vld [vmem:[%s918 + $0xc] sm:$0xf]
        %v923 = vld [vmem:[%s918 + $0x10] sm:$0xf]
        %v924 = vld [vmem:[%s918 + $0x14] sm:$0xf]
        %v925 = vld [vmem:[%s918 + $0x18] sm:$0xf]
        %v926 = vld [vmem:[%s918 + $0x1c] sm:$0xf]
        %v927 = vld [vmem:[%s918 + $0x20] sm:$0xf]
        %v928 = vld [vmem:[%s918 + $0x24] sm:$0xf]
        %v929 = vld [vmem:[%s918 + $0x28] sm:$0xf]
        %v930 = vld [vmem:[%s918 + $0x2c] sm:$0xf]
        %v931 = vld [vmem:[%s918 + $0x30] sm:$0xf]
        %v932 = vld [vmem:[%s918 + $0x34] sm:$0xf]
        %v933 = vld [vmem:[%s918 + $0x38] sm:$0xf]
        %v934 = vld [vmem:[%s918 + $0x3c] sm:$0xf]
        %v951 = vunpack.c.l.b16 %v919
        %v952 = vunpack.c.l.b16 %v920
        %v953 = vunpack.c.l.b16 %v921
        %v954 = vunpack.c.l.b16 %v922
        %v955 = vunpack.c.l.b16 %v923
        %v956 = vunpack.c.l.b16 %v924
        %v957 = vunpack.c.l.b16 %v925
        %v958 = vunpack.c.l.b16 %v926
        %v959 = vunpack.c.l.b16 %v927
        %v960 = vunpack.c.l.b16 %v928
        %v961 = vunpack.c.l.b16 %v929
        %v962 = vunpack.c.l.b16 %v930
        %v963 = vunpack.c.l.b16 %v931
        %v964 = vunpack.c.l.b16 %v932
        %v965 = vunpack.c.l.b16 %v933
        %v966 = vunpack.c.l.b16 %v934
        %v967 = vpack.c.b16 %v952, %v951
        %v968 = vpack.c.b16 %v954, %v953
        %v969 = vpack.c.b16 %v956, %v955
        %v970 = vpack.c.b16 %v958, %v957
        %v971 = vpack.c.b16 %v960, %v959
        %v972 = vpack.c.b16 %v962, %v961
        %v973 = vpack.c.b16 %v964, %v963
        %v974 = vpack.c.b16 %v966, %v965
        %983 = vmatprep.subr.bf16.mxu0 0
        %984 = vmatpush1.bf16.msra.mxu0 %v533
        %985 = vmatprep.subr.bf16.mxu0 0
        %986 = vmatpush1.bf16.msra.mxu0 %v534
        %987 = vmatprep.subr.bf16.mxu0 0
        %988 = vmatpush1.bf16.msra.mxu0 %v535
        %989 = vmatprep.subr.bf16.mxu0 0
        %990 = vmatpush1.bf16.msra.mxu0 %v536
        %991 = vmatprep.subr.bf16.mxu0 0
        %992 = vmatpush1.bf16.msra.mxu0 %v537
        %993 = vmatprep.subr.bf16.mxu0 0
        %994 = vmatpush1.bf16.msra.mxu0 %v538
        %995 = vmatprep.subr.bf16.mxu0 0
        %996 = vmatpush1.bf16.msra.mxu0 %v539
        %997 = vmatprep.subr.bf16.mxu0 0
        %998 = vmatpush1.bf16.msra.mxu0 %v540
        %999 = vmatprep.subr.bf16.mxu0 0
        %1000 = vmatpush1.bf16.msra.mxu0 0
        %1001 = vmatprep.subr.bf16.mxu0 0
        %1002 = vmatpush1.bf16.msra.mxu0 0
        %1003 = vmatprep.subr.bf16.mxu0 0
        %1004 = vmatpush1.bf16.msra.mxu0 0
        %1005 = vmatprep.subr.bf16.mxu0 0
        %1006 = vmatpush1.bf16.msra.mxu0 0
        %1007 = vmatprep.subr.bf16.mxu0 0
        %1008 = vmatpush1.bf16.msra.mxu0 0
        %1009 = vmatprep.subr.bf16.mxu0 0
        %1010 = vmatpush1.bf16.msra.mxu0 0
        %1011 = vmatprep.subr.bf16.mxu0 0
        %1012 = vmatpush1.bf16.msra.mxu0 0
        %1013 = vmatprep.subr.bf16.mxu0 0
        %1014 = vmatpush1.bf16.msra.mxu0 0
        %1015 = vmatprep.mubr.bf16.mxu0 0
        %1016 = vmatmul.mubr.bf16.gmra.mrb[0].mxu0 %v967
        %v1017 = vpop.f32.mrb[0].mxu0
        %v1018 = vadd.f32 0.0, %v1017
        %v1019 = vpop.f32.mrb[0].mxu0
        %v1020 = vpop.f32.mrb[0].mxu0
        %v1021 = vadd.f32 0.0, %v1020
        %v1022 = vpop.f32.mrb[0].mxu0
        %1023 = vmatprep.mubr.bf16.mxu0 0
        %1024 = vmatmul.mubr.bf16.gmra.mrb[0].mxu0 %v968
        %v1025 = vpop.f32.mrb[0].mxu0
        %v1026 = vadd.f32 0.0, %v1025
        %v1027 = vpop.f32.mrb[0].mxu0
        %v1028 = vpop.f32.mrb[0].mxu0
        %v1029 = vadd.f32 0.0, %v1028
        %v1030 = vpop.f32.mrb[0].mxu0
        %1031 = vmatprep.mubr.bf16.mxu0 0
        %1032 = vmatmul.mubr.bf16.gmra.mrb[0].mxu0 %v969
        %v1033 = vpop.f32.mrb[0].mxu0
        %v1034 = vadd.f32 0.0, %v1033
        %v1035 = vpop.f32.mrb[0].mxu0
        %v1036 = vpop.f32.mrb[0].mxu0
        %v1037 = vadd.f32 0.0, %v1036
        %v1038 = vpop.f32.mrb[0].mxu0
        %1039 = vmatprep.mubr.bf16.mxu0 0
        %1040 = vmatmul.mubr.bf16.gmra.mrb[0].mxu0 %v970
        %v1041 = vpop.f32.mrb[0].mxu0
        %v1042 = vadd.f32 0.0, %v1041
        %v1043 = vpop.f32.mrb[0].mxu0
        %v1044 = vpop.f32.mrb[0].mxu0
        %v1045 = vadd.f32 0.0, %v1044
        %v1046 = vpop.f32.mrb[0].mxu0
        %1047 = vmatprep.mubr.bf16.mxu0 0
        %1048 = vmatmul.mubr.bf16.gmra.mrb[0].mxu0 %v971
        %v1049 = vpop.f32.mrb[0].mxu0
        %v1050 = vadd.f32 0.0, %v1049
        %v1051 = vpop.f32.mrb[0].mxu0
        %v1052 = vpop.f32.mrb[0].mxu0
        %v1053 = vadd.f32 0.0, %v1052
        %v1054 = vpop.f32.mrb[0].mxu0
        %1055 = vmatprep.mubr.bf16.mxu0 0
        %1056 = vmatmul.mubr.bf16.gmra.mrb[0].mxu0 %v972
        %v1057 = vpop.f32.mrb[0].mxu0
        %v1058 = vadd.f32 0.0, %v1057
        %v1059 = vpop.f32.mrb[0].mxu0
        %v1060 = vpop.f32.mrb[0].mxu0
        %v1061 = vadd.f32 0.0, %v1060
        %v1062 = vpop.f32.mrb[0].mxu0
        %1063 = vmatprep.mubr.bf16.mxu0 0
        %1064 = vmatmul.mubr.bf16.gmra.mrb[0].mxu0 %v973
        %v1065 = vpop.f32.mrb[0].mxu0
        %v1066 = vadd.f32 0.0, %v1065
        %v1067 = vpop.f32.mrb[0].mxu0
        %v1068 = vpop.f32.mrb[0].mxu0
        %v1069 = vadd.f32 0.0, %v1068
        %v1070 = vpop.f32.mrb[0].mxu0
        %1071 = vmatprep.mubr.bf16.mxu0 0
        %1072 = vmatmul.mubr.bf16.gmra.mrb[0].mxu0 %v974
        %v1073 = vpop.f32.mrb[0].mxu0
        %v1074 = vadd.f32 0.0, %v1073
        %v1075 = vpop.f32.mrb[0].mxu0
        %v1076 = vpop.f32.mrb[0].mxu0
        %v1077 = vadd.f32 0.0, %v1076
        %v1078 = vpop.f32.mrb[0].mxu0
        %1079 = vdwg.mxu0
        %s1080 = sadd.s32 %s702, 2
        %s1081 = sld [smem:[#allocation3 + %s1080]]
        %v1082 = vstv %s1081
        %v1083 = vmul.f32 %v1018, %v1082
        %v1084 = vmul.f32 %v1021, %v1082
        %v1085 = vmul.f32 %v1026, %v1082
        %v1086 = vmul.f32 %v1029, %v1082
        %v1087 = vmul.f32 %v1034, %v1082
        %v1088 = vmul.f32 %v1037, %v1082
        %v1089 = vmul.f32 %v1042, %v1082
        %v1090 = vmul.f32 %v1045, %v1082
        %v1091 = vmul.f32 %v1050, %v1082
        %v1092 = vmul.f32 %v1053, %v1082
        %v1093 = vmul.f32 %v1058, %v1082
        %v1094 = vmul.f32 %v1061, %v1082
        %v1095 = vmul.f32 %v1066, %v1082
        %v1096 = vmul.f32 %v1069, %v1082
        %v1097 = vmul.f32 %v1074, %v1082
        %v1098 = vmul.f32 %v1077, %v1082
        %v1099 = vadd.f32 %v902, %v1083
        %v1100 = vadd.f32 %v903, %v1084
        %v1101 = vadd.f32 %v904, %v1085
        %v1102 = vadd.f32 %v905, %v1086
        %v1103 = vadd.f32 %v906, %v1087
        %v1104 = vadd.f32 %v907, %v1088
        %v1105 = vadd.f32 %v908, %v1089
        %v1106 = vadd.f32 %v909, %v1090
        %v1107 = vadd.f32 %v910, %v1091
        %v1108 = vadd.f32 %v911, %v1092
        %v1109 = vadd.f32 %v912, %v1093
        %v1110 = vadd.f32 %v913, %v1094
        %v1111 = vadd.f32 %v914, %v1095
        %v1112 = vadd.f32 %v915, %v1096
        %v1113 = vadd.f32 %v916, %v1097
        %v1114 = vadd.f32 %v917, %v1098
        %v1115 = vmax.f32 %v1099, 0.0
        %v1116 = vmax.f32 %v1100, 0.0
        %v1117 = vmax.f32 %v1101, 0.0
        %v1118 = vmax.f32 %v1102, 0.0
        %v1119 = vmax.f32 %v1103, 0.0
        %v1120 = vmax.f32 %v1104, 0.0
        %v1121 = vmax.f32 %v1105, 0.0
        %v1122 = vmax.f32 %v1106, 0.0
        %v1123 = vmax.f32 %v1107, 0.0
        %v1124 = vmax.f32 %v1108, 0.0
        %v1125 = vmax.f32 %v1109, 0.0
        %v1126 = vmax.f32 %v1110, 0.0
        %v1127 = vmax.f32 %v1111, 0.0
        %v1128 = vmax.f32 %v1112, 0.0
        %v1129 = vmax.f32 %v1113, 0.0
        %v1130 = vmax.f32 %v1114, 0.0
        %v1131 = vadd.f32 %v341, %v1115
        %v1132 = vadd.f32 %v342, %v1116
        %v1133 = vadd.f32 %v343, %v1117
        %v1134 = vadd.f32 %v344, %v1118
        %v1135 = vadd.f32 %v345, %v1119
        %v1136 = vadd.f32 %v346, %v1120
        %v1137 = vadd.f32 %v347, %v1121
        %v1138 = vadd.f32 %v348, %v1122
        %v1139 = vadd.f32 %v349, %v1123
        %v1140 = vadd.f32 %v350, %v1124
        %v1141 = vadd.f32 %v351, %v1125
        %v1142 = vadd.f32 %v352, %v1126
        %v1143 = vadd.f32 %v353, %v1127
        %v1144 = vadd.f32 %v354, %v1128
        %v1145 = vadd.f32 %v355, %v1129
        %v1146 = vadd.f32 %v356, %v1130
        %v1147 = vmul.f32 %v1131, %v1131
        %v1148 = vmul.f32 %v1132, %v1132
        %v1149 = vmul.f32 %v1133, %v1133
        %v1150 = vmul.f32 %v1134, %v1134
        %v1151 = vmul.f32 %v1135, %v1135
        %v1152 = vmul.f32 %v1136, %v1136
        %v1153 = vmul.f32 %v1137, %v1137
        %v1154 = vmul.f32 %v1138, %v1138
        %v1155 = vmul.f32 %v1139, %v1139
        %v1156 = vmul.f32 %v1140, %v1140
        %v1157 = vmul.f32 %v1141, %v1141
        %v1158 = vmul.f32 %v1142, %v1142
        %v1159 = vmul.f32 %v1143, %v1143
        %v1160 = vmul.f32 %v1144, %v1144
        %v1161 = vmul.f32 %v1145, %v1145
        %v1162 = vmul.f32 %v1146, %v1146
        %1163 = vadd.xlane.f32.xlu0 %v1147
        %v1164 = vpop.xlane.xlu0 %1163
        %1165 = vadd.xlane.f32.xlu0 %v1148
        %v1166 = vpop.xlane.xlu0 %1165
        %1167 = vadd.xlane.f32.xlu0 %v1149
        %v1168 = vpop.xlane.xlu0 %1167
        %1169 = vadd.xlane.f32.xlu0 %v1150
        %v1170 = vpop.xlane.xlu0 %1169
        %1171 = vadd.xlane.f32.xlu0 %v1151
        %v1172 = vpop.xlane.xlu0 %1171
        %1173 = vadd.xlane.f32.xlu0 %v1152
        %v1174 = vpop.xlane.xlu0 %1173
        %1175 = vadd.xlane.f32.xlu0 %v1153
        %v1176 = vpop.xlane.xlu0 %1175
        %1177 = vadd.xlane.f32.xlu0 %v1154
        %v1178 = vpop.xlane.xlu0 %1177
        %1179 = vadd.xlane.f32.xlu0 %v1155
        %v1180 = vpop.xlane.xlu0 %1179
        %1181 = vadd.xlane.f32.xlu0 %v1156
        %v1182 = vpop.xlane.xlu0 %1181
        %1183 = vadd.xlane.f32.xlu0 %v1157
        %v1184 = vpop.xlane.xlu0 %1183
        %1185 = vadd.xlane.f32.xlu0 %v1158
        %v1186 = vpop.xlane.xlu0 %1185
        %1187 = vadd.xlane.f32.xlu0 %v1159
        %v1188 = vpop.xlane.xlu0 %1187
        %1189 = vadd.xlane.f32.xlu0 %v1160
        %v1190 = vpop.xlane.xlu0 %1189
        %1191 = vadd.xlane.f32.xlu0 %v1161
        %v1192 = vpop.xlane.xlu0 %1191
        %1193 = vadd.xlane.f32.xlu0 %v1162
        %v1194 = vpop.xlane.xlu0 %1193
        %v1195 = vmax.f32 %v1164, 1e-24
        %v1196 = vmax.f32 %v1166, 1e-24
        %v1197 = vmax.f32 %v1168, 1e-24
        %v1198 = vmax.f32 %v1170, 1e-24
        %v1199 = vmax.f32 %v1172, 1e-24
        %v1200 = vmax.f32 %v1174, 1e-24
        %v1201 = vmax.f32 %v1176, 1e-24
        %v1202 = vmax.f32 %v1178, 1e-24
        %v1203 = vmax.f32 %v1180, 1e-24
        %v1204 = vmax.f32 %v1182, 1e-24
        %v1205 = vmax.f32 %v1184, 1e-24
        %v1206 = vmax.f32 %v1186, 1e-24
        %v1207 = vmax.f32 %v1188, 1e-24
        %v1208 = vmax.f32 %v1190, 1e-24
        %v1209 = vmax.f32 %v1192, 1e-24
        %v1210 = vmax.f32 %v1194, 1e-24
        %v1211 = vrsqrt.pop %v1195
        %v1212 = vrsqrt.pop %v1196
        %v1213 = vrsqrt.pop %v1197
        %v1214 = vrsqrt.pop %v1198
        %v1215 = vrsqrt.pop %v1199
        %v1216 = vrsqrt.pop %v1200
        %v1217 = vrsqrt.pop %v1201
        %v1218 = vrsqrt.pop %v1202
        %v1219 = vrsqrt.pop %v1203
        %v1220 = vrsqrt.pop %v1204
        %v1221 = vrsqrt.pop %v1205
        %v1222 = vrsqrt.pop %v1206
        %v1223 = vrsqrt.pop %v1207
        %v1224 = vrsqrt.pop %v1208
        %v1225 = vrsqrt.pop %v1209
        %v1226 = vrsqrt.pop %v1210
        %v1227 = vmul.f32 %v1131, %v1211
        %v1228 = vmul.f32 %v1132, %v1212
        %v1229 = vmul.f32 %v1133, %v1213
        %v1230 = vmul.f32 %v1134, %v1214
        %v1231 = vmul.f32 %v1135, %v1215
        %v1232 = vmul.f32 %v1136, %v1216
        %v1233 = vmul.f32 %v1137, %v1217
        %v1234 = vmul.f32 %v1138, %v1218
        %v1235 = vmul.f32 %v1139, %v1219
        %v1236 = vmul.f32 %v1140, %v1220
        %v1237 = vmul.f32 %v1141, %v1221
        %v1238 = vmul.f32 %v1142, %v1222
        %v1239 = vmul.f32 %v1143, %v1223
        %v1240 = vmul.f32 %v1144, %v1224
        %v1241 = vmul.f32 %v1145, %v1225
        %v1242 = vmul.f32 %v1146, %v1226
        %1243 = vst [vmem:[#allocation2] sm:$0xff] %v1227
        %1244 = vst [vmem:[#allocation2 + $0x8] sm:$0xff] %v1228
        %1245 = vst [vmem:[#allocation2 + $0x10] sm:$0xff] %v1229
        %1246 = vst [vmem:[#allocation2 + $0x18] sm:$0xff] %v1230
        %1247 = vst [vmem:[#allocation2 + $0x20] sm:$0xff] %v1231
        %1248 = vst [vmem:[#allocation2 + $0x28] sm:$0xff] %v1232
        %1249 = vst [vmem:[#allocation2 + $0x30] sm:$0xff] %v1233
        %1250 = vst [vmem:[#allocation2 + $0x38] sm:$0xff] %v1234
        %1251 = vst [vmem:[#allocation2 + $0x40] sm:$0xff] %v1235
        %1252 = vst [vmem:[#allocation2 + $0x48] sm:$0xff] %v1236
        %1253 = vst [vmem:[#allocation2 + $0x50] sm:$0xff] %v1237
        %1254 = vst [vmem:[#allocation2 + $0x58] sm:$0xff] %v1238
        %1255 = vst [vmem:[#allocation2 + $0x60] sm:$0xff] %v1239
        %1256 = vst [vmem:[#allocation2 + $0x68] sm:$0xff] %v1240
        %1257 = vst [vmem:[#allocation2 + $0x70] sm:$0xff] %v1241
        %1258 = vst [vmem:[#allocation2 + $0x78] sm:$0xff] %v1242
        %p1259 = scmp.eq.s32.totalorder %s23, 2
        // Predicated region
        $region65: #{sp_gnn_stage.1} parent=39 // pred_check
          %p1260 = pneg %p1259
        $region66: #{sp_gnn_stage.1} parent=39 // pred_check_branch
          %1262 = sbr.rel (%p1260) target = $region68
        $region67: #{sp_gnn_stage.1} parent=39 // pred_region
          %1263 = vst [vmem:[#allocation13] sm:$0xff] %v1227
          %1264 = vst [vmem:[#allocation13 + $0x8] sm:$0xff] %v1228
          %1265 = vst [vmem:[#allocation13 + $0x10] sm:$0xff] %v1229
          %1266 = vst [vmem:[#allocation13 + $0x18] sm:$0xff] %v1230
          %1267 = vst [vmem:[#allocation13 + $0x20] sm:$0xff] %v1231
          %1268 = vst [vmem:[#allocation13 + $0x28] sm:$0xff] %v1232
          %1269 = vst [vmem:[#allocation13 + $0x30] sm:$0xff] %v1233
          %1270 = vst [vmem:[#allocation13 + $0x38] sm:$0xff] %v1234
          %1271 = vst [vmem:[#allocation13 + $0x40] sm:$0xff] %v1235
          %1272 = vst [vmem:[#allocation13 + $0x48] sm:$0xff] %v1236
          %1273 = vst [vmem:[#allocation13 + $0x50] sm:$0xff] %v1237
          %1274 = vst [vmem:[#allocation13 + $0x58] sm:$0xff] %v1238
          %1275 = vst [vmem:[#allocation13 + $0x60] sm:$0xff] %v1239
          %1276 = vst [vmem:[#allocation13 + $0x68] sm:$0xff] %v1240
          %1277 = vst [vmem:[#allocation13 + $0x70] sm:$0xff] %v1241
          %1278 = vst [vmem:[#allocation13 + $0x78] sm:$0xff] %v1242
        $region68: #{sp_gnn_stage.1} parent=39 // pred_fallthru
          _
        // Predicated region
        $region69: #{sp_gnn_stage.1} parent=39 // pred_check
          %p1279 = pneg %p151
        $region70: #{sp_gnn_stage.1} parent=39 // pred_check_branch
          %1281 = sbr.rel (%p1279) target = $region72
        $region71: #{sp_gnn_stage.1} parent=39 // pred_region
          %s1283 = ssub.s32 2048, 2048
          %1284 = vsyncadd [#allocation5], %s1283
          %s1285 = sshll.u32 [#allocation13], 4
          %s1286 = int_to_ptr.vmem [resolvable:$true] %s1285
          %1291 = dma.vmem_to_hbm [thread:$0]  %s1286, 2048, %s5, [#allocation5], 128, 128, 8
        $region72: #{sp_gnn_stage.1} parent=39 // pred_fallthru
          _
        // Predicated region
        $region73: #{sp_gnn_stage.1} parent=39 // pred_check
          %p1292 = pneg %p151
        $region74: #{sp_gnn_stage.1} parent=39 // pred_check_branch
          %1294 = sbr.rel (%p1292) target = $region76
        $region75: #{sp_gnn_stage.1} parent=39 // pred_region
          %1295 = dma.done [#allocation5], 2048
        $region76: #{sp_gnn_stage.1} parent=39 // pred_fallthru
          _
      $region40: #{sp_gnn_stage.1} parent=5 // pred_fallthru
        _
      %p1296 = scmp.le.s32.totalorder 2, %s18
      // Predicated region
      $region77: #{sp_gnn_stage.1} parent=5 // pred_check
        %p1297 = pneg %p1296
      $region78: #{sp_gnn_stage.1} parent=5 // pred_check_branch
        %1299 = sbr.rel (%p1297) target = $region80
      $region79: #{sp_gnn_stage.1} parent=5 // pred_region
        %s1300 = ssub.s32 %s18, 2
      $region80: #{sp_gnn_stage.1} parent=5 // pred_fallthru
        _
    $region6: #{sp_gnn_stage.1} parent=1 // loop_footer
      %s22 = sadd.s32 1, %s18
    $region7: #{sp_gnn_stage.1} parent=1 // loop_footer_branch
      %17 = sbr.rel target = $region3
    $region8: #{sp_gnn_stage.1} parent=1 // loop_exit
      _
    %1301 = vsyncpa [#allocation4], 1
    %s1302 = scalar_lea.sflag [#allocation4], 1
    %1303 = vsyncpa %s1302, 1
    %1304 = vsyncpa [#allocation9], 1
    %s1305 = scalar_lea.sflag [#allocation9], 1
    %1306 = vsyncpa %s1305, 1
    %1307 = vsyncpa [#allocation12], 1
    %1308 = vsyncpa [#allocation5], 1
    %s1309 = scalar_lea.sflag [#allocation5], 1
    %1310 = vsyncpa %s1309, 1
    %1311 = vsyncpa [#allocation6], 1
    %s1312 = scalar_lea.sflag [#allocation6], 1
    %1313 = vsyncpa %s1312, 1

</llo_original>
